<compile_context>
chip_gen: v5e
topology: v5e:2x2
jax: 0.10.0
libtpu: 0.0.40
codegen_flags: <defaults>
</compile_context>

<pallas_src>
import functools

import jax
import jax.numpy as jnp
from jax.experimental import pallas as pl
from jax.experimental.pallas import tpu as pltpu

# ---------------- config (stand-ins for the detectron2 cfg) ----------------
PIXEL_MEAN = (123.675, 116.28, 103.53)
PIXEL_STD = (58.395, 57.12, 57.375)
POOLER_RESOLUTION = 7
SAMPLING_RATIO = 2
IMG_H = IMG_W = 16
C_STEM = 64        # stand-in for the real ResNet stem width; VMEM-resident only (never HBM)
C_OUT = 128        # stand-in for backbone output channels ("res5" = 2048); lane-dense (128)
BACKBONE_STRIDE = 2
POOLER_SCALE = 1.0 / BACKBONE_STRIDE
K1_PAD = 32        # conv1 im2col K = 3*3*3 = 27, zero-padded to a sublane-friendly 32

VMEM_LIMIT_BYTES = 32 * 1024 * 1024   # tiny kernel; TODO(synk): re-derive for v7x 64 MiB at scale


# --------------------------------------------------------------------------
# Kernel 1: fused backbone stand-in
#   conv1(3x3,s2) + FrozenBN + ReLU + conv2(3x3,s1) + FrozenBN + ReLU
#   Two MXU matmuls total; intermediate activation stays in VMEM.
# --------------------------------------------------------------------------
def _backbone_kernel(x1_ref, w1_ref, s1_ref, b1_ref, w2_ref, s2_ref, b2_ref,
                     f_ref, h1p_ref, *, n, ho1, wo1, c1, k, ho2, wo2):
    """x1_ref: (n*ho1*wo1, K1_PAD) bf16 im2col of the mean-padded raw image;
       w1_ref: (K1_PAD, c1) bf16 (normalization-folded); s1/b1: (1, c1) f32;
       w2_ref: (k*k*c1, C_OUT) bf16; s2/b2: (1, C_OUT) f32;
       f_ref : (n*ho2*wo2, C_OUT) f32 output; h1p_ref: (n, ho1+2, wo1+2, c1) bf16 scratch."""
    # ---- conv1: single MXU matmul, batch folded into M ---------------------------------
    h1 = jnp.dot(x1_ref[...], w1_ref[...], preferred_element_type=jnp.float32)
    h1 = jnp.maximum(h1 * s1_ref[...] + b1_ref[...], 0.0)       # FrozenBN affine + ReLU (f32)
    h1 = h1.astype(jnp.bfloat16)

    # ---- spatially zero-pad the VMEM-resident intermediate (conv2 pad=1) ---------------
    h1p_ref[...] = jnp.zeros_like(h1p_ref)
    h1p_ref[:, 1:1 + ho1, 1:1 + wo1, :] = h1.reshape(n, ho1, wo1, c1)

    # ---- conv2: 9 taps concatenated along K -> ONE MXU matmul --------------------------
    #      M = n*ho2*wo2 = 128, K = k*k*c1 = 576, N = C_OUT = 128
    taps = [h1p_ref[:, dy:dy + ho2, dx:dx + wo2, :].reshape(n * ho2 * wo2, c1)
            for dy in range(k) for dx in range(k)]
    xcol2 = jnp.concatenate(taps, axis=-1)                       # (M, k*k*c1) bf16
    h2 = jnp.dot(xcol2, w2_ref[...], preferred_element_type=jnp.float32)
    # FrozenBN affine + ReLU in f32, lane-dense (128-wide) f32 store.
    f_ref[...] = jnp.maximum(h2 * s2_ref[...] + b2_ref[...], 0.0)


def backbone_forward(images_nhwc, w1f, s1, b1f, w2, s2, b2, *, pad_value):
    """Fused 2-layer backbone stand-in. Returns (features (n*hf*wf, C_OUT) f32, hf, wf)."""
    n, h, w, cin = images_nhwc.shape
    k = 3
    s = BACKBONE_STRIDE
    ho1 = (h + 2 - k) // s + 1
    wo1 = (w + 2 - k) // s + 1
    ho2, wo2 = ho1, wo1                                          # conv2: 3x3, stride 1, pad 1

    # Pad the RAW image with the per-channel pixel mean: required for the exact
    # normalization fold into conv1 (mean-padded raw pixels normalize to 0).
    hp, wp = h + 2, w + 2
    xp = jnp.broadcast_to(pad_value.reshape(1, 1, 1, cin).astype(images_nhwc.dtype),
                          (n, hp, wp, cin))
    xp = jax.lax.dynamic_update_slice(xp, images_nhwc, (0, 1, 1, 0))

    # Glue im2col for the 3-channel stem only (tiny).  Rows ordered (img, oy, ox),
    # columns ordered (dy, dx, cin) to match w1.reshape(k*k*cin, C_STEM).
    cols = [xp[:, dy:dy + s * ho1:s, dx:dx + s * wo1:s, :]
            for dy in range(k) for dx in range(k)]               # each (n, ho1, wo1, cin)
    x1col = jnp.concatenate(cols, axis=-1).reshape(n * ho1 * wo1, k * k * cin)
    x1col = jnp.pad(x1col, ((0, 0), (0, K1_PAD - k * k * cin))).astype(jnp.bfloat16)

    w1mat = jnp.pad(w1f.reshape(k * k * cin, C_STEM),
                    ((0, K1_PAD - k * k * cin), (0, 0))).astype(jnp.bfloat16)
    w2mat = w2.reshape(k * k * C_STEM, C_OUT).astype(jnp.bfloat16)

    m1 = n * ho1 * wo1
    m2 = n * ho2 * wo2
    flops = 2 * m1 * K1_PAD * C_STEM + 2 * m2 * (k * k * C_STEM) * C_OUT
    bytes_accessed = (x1col.size * 2 + w1mat.size * 2 + w2mat.size * 2
                      + (s1.size + b1f.size + s2.size + b2.size) * 4
                      + m2 * C_OUT * 4)

    f = pl.pallas_call(
        functools.partial(_backbone_kernel, n=n, ho1=ho1, wo1=wo1, c1=C_STEM,
                          k=k, ho2=ho2, wo2=wo2),
        out_shape=jax.ShapeDtypeStruct((m2, C_OUT), jnp.float32),
        grid=(1,),
        in_specs=[
            pl.BlockSpec((m1, K1_PAD), lambda i: (0, 0)),
            pl.BlockSpec((K1_PAD, C_STEM), lambda i: (0, 0)),
            pl.BlockSpec((1, C_STEM), lambda i: (0, 0)),
            pl.BlockSpec((1, C_STEM), lambda i: (0, 0)),
            pl.BlockSpec((k * k * C_STEM, C_OUT), lambda i: (0, 0)),
            pl.BlockSpec((1, C_OUT), lambda i: (0, 0)),
            pl.BlockSpec((1, C_OUT), lambda i: (0, 0)),
        ],
        out_specs=pl.BlockSpec((m2, C_OUT), lambda i: (0, 0)),
        scratch_shapes=[pltpu.VMEM((n, ho1 + 2, wo1 + 2, C_STEM), jnp.bfloat16)],
        compiler_params=pltpu.CompilerParams(
            dimension_semantics=("arbitrary",),
            vmem_limit_bytes=VMEM_LIMIT_BYTES),
        cost_estimate=pl.CostEstimate(flops=flops, transcendentals=0,
                                      bytes_accessed=bytes_accessed),
    )(x1col, w1mat, s1.astype(jnp.float32), b1f.astype(jnp.float32),
      w2mat, s2.astype(jnp.float32), b2.astype(jnp.float32))
    return f, ho2, wo2


# --------------------------------------------------------------------------
# Kernel 2: ROIAlignV2 + global average pool as ONE dense MXU matmul (no grid)
# --------------------------------------------------------------------------
def _roi_pool_kernel(w_ref, f_ref, o_ref):
    """w_ref: (B, N*Hf*Wf) f32 averaged-bilinear weights (zero columns for other images);
       f_ref: (N*Hf*Wf, C) f32 features; o_ref: (B, C) f32."""
    o_ref[...] = jnp.dot(w_ref[...], f_ref[...], preferred_element_type=jnp.float32)


def _avg_bilinear_weights(lo, hi, scale, size, resolution, sampling_ratio):
    """Averaged (over R bins x S samples) bilinear interpolation weights along one axis.

    ROIAlignV2 (aligned=True): sample coords = box*scale - 0.5, no min-size clamp.
    Returns (num_boxes, size) such that
      avgpool(ROIAlign(F))[b, c] = sum_{h,w} wy[b,h] * wx[b,w] * F[img(b), h, w, c].
    """
    start = lo * scale - 0.5
    roi_len = (hi - lo) * scale
    bin_sz = roi_len / resolution
    ph = jnp.arange(resolution, dtype=jnp.float32)
    s = jnp.arange(sampling_ratio, dtype=jnp.float32)
    frac = ph[:, None] + (s[None, :] + 0.5) / sampling_ratio               # (R, S)
    pts = start[:, None, None] + frac[None, :, :] * bin_sz[:, None, None]  # (B, R, S)
    valid = (pts >= -1.0) & (pts <= size)                                  # ROIAlign skip rule
    pts_c = jnp.clip(pts, 0.0, size - 1.0)
    grid = jnp.arange(size, dtype=jnp.float32)
    tri = jnp.maximum(0.0, 1.0 - jnp.abs(pts_c[..., None] - grid))         # (B, R, S, size)
    tri = tri * valid[..., None].astype(jnp.float32)
    return tri.mean(axis=(1, 2))                                           # (B, size)


def roi_align_avg_pool(features_flat, n, hf, wf, boxes_xyxy, box_img_idx,
                       scale, resolution, sampling_ratio):
    """features_flat: (n*hf*wf, C) f32 with rows ordered (img, h, w). Returns (B, C) f32."""
    c = features_flat.shape[-1]
    b = boxes_xyxy.shape[0]
    wy = _avg_bilinear_weights(boxes_xyxy[:, 1], boxes_xyxy[:, 3], scale, hf,
                               resolution, sampling_ratio)                 # (B, Hf)
    wx = _avg_bilinear_weights(boxes_xyxy[:, 0], boxes_xyxy[:, 2], scale, wf,
                               resolution, sampling_ratio)                 # (B, Wf)
    w2d = (wy[:, :, None] * wx[:, None, :]).reshape(b, hf * wf)            # (B, Hf*Wf)
    # route each box's weights only to its own image (zero columns elsewhere) -> (B, N*Hf*Wf)
    # TODO(synk): at real scale replace zero-column routing with PrefetchScalarGridSpec
    #             per-image box offsets so work stays at sum(boxes) instead of N*B.
    img_mask = (box_img_idx[:, None] == jnp.arange(n, dtype=jnp.int32)[None, :]
                ).astype(jnp.float32)                                      # (B, N)
    w_all = (img_mask[:, :, None] * w2d[:, None, :]).reshape(b, n * hf * wf)

    flops = 2 * b * (n * hf * wf) * c
    bytes_accessed = (w_all.size + features_flat.size + b * c) * 4
    out = pl.pallas_call(
        _roi_pool_kernel,
        out_shape=jax.ShapeDtypeStruct((b, c), jnp.float32),
        grid=(1,),
        in_specs=[
            pl.BlockSpec((b, n * hf * wf), lambda i: (0, 0)),
            pl.BlockSpec((n * hf * wf, c), lambda i: (0, 0)),
        ],
        out_specs=pl.BlockSpec((b, c), lambda i: (0, 0)),
        compiler_params=pltpu.CompilerParams(
            dimension_semantics=("arbitrary",),
            vmem_limit_bytes=VMEM_LIMIT_BYTES),
        cost_estimate=pl.CostEstimate(flops=flops, transcendentals=0,
                                      bytes_accessed=bytes_accessed),
    )(w_all, features_flat)
    return out


# --------------------------------------------------------------------------
# Parameters (deterministic, synthetic), normalization fold, forward wrapper
# --------------------------------------------------------------------------
def init_params(key):
    k1, k2, k3, k4, k5, k6 = jax.random.split(key, 6)
    w1 = jax.random.normal(k1, (3, 3, 3, C_STEM), jnp.float32) * 0.1
    w2 = jax.random.normal(k2, (3, 3, C_STEM, C_OUT), jnp.float32) * 0.1

    def frozen_bn(kg, kb, ch):
        gamma = jax.random.uniform(kg, (ch,), jnp.float32, 0.5, 1.5)
        beta = jax.random.normal(kb, (ch,), jnp.float32) * 0.1
        running_mean = jnp.zeros((ch,), jnp.float32)
        running_var = jnp.ones((ch,), jnp.float32)
        scale = gamma / jnp.sqrt(running_var + 1e-5)
        bias = beta - running_mean * scale
        return scale.reshape(1, ch), bias.reshape(1, ch)

    s1, b1 = frozen_bn(k3, k4, C_STEM)
    s2, b2 = frozen_bn(k5, k6, C_OUT)
    return dict(w1=w1, s1=s1, b1=b1, w2=w2, s2=s2, b2=b2)


def _fold_normalization_into_conv1(w1, s1, b1, mean, std):
    """(x - mean)/std folded into conv1.  Exact ONLY because the raw image is padded with
    the per-channel pixel `mean` in backbone_forward (mean-padded raw == zero-padded norm)."""
    inv_std = 1.0 / std                                            # (3,)
    w1_folded = w1 * inv_std.reshape(1, 1, -1, 1)                  # scale per input channel
    shift = -jnp.einsum('hwio,i->o', w1, mean * inv_std)           # constant -mean/std term
    b1_folded = b1 + s1 * shift.reshape(1, -1)                     # through the FrozenBN affine
    return w1_folded, b1_folded


def diffdet_resnet_roi_pool_forward(params, images_nchw, gt_boxes_list, gt_classes_list):
    mean = jnp.asarray(PIXEL_MEAN, jnp.float32)
    std = jnp.asarray(PIXEL_STD, jnp.float32)
    x = jnp.transpose(images_nchw, (0, 2, 3, 1))                   # NCHW -> NHWC (glue)

    # preprocess_image fused into conv1 (no standalone normalization kernel / HBM pass).
    # ImageList padding is a no-op: inputs already share a stride-divisible shape.
    w1f, b1f = _fold_normalization_into_conv1(params["w1"], params["s1"], params["b1"],
                                              mean, std)

    # backbone stand-in: single fused Pallas kernel (conv1 s2 + BN + ReLU + conv2 s1 + BN + ReLU)
    f, hf, wf = backbone_forward(x, w1f, params["s1"], b1f,
                                 params["w2"], params["s2"], params["b2"], pad_value=mean)

    # pooler over gt_boxes (single feature level) + AdaptiveAvgPool2d((1,1)).squeeze, fused.
    n = x.shape[0]
    boxes = jnp.concatenate(gt_boxes_list, axis=0)
    box_img = jnp.concatenate(
        [jnp.full((bx.shape[0],), i, jnp.int32) for i, bx in enumerate(gt_boxes_list)], axis=0)
    box_features = roi_align_avg_pool(f, n, hf, wf, boxes, box_img, POOLER_SCALE,
                                      POOLER_RESOLUTION, SAMPLING_RATIO)
    return box_features, gt_classes_list


if __name__ == "__main__":
    key = jax.random.PRNGKey(0)
    kimg, kparam = jax.random.split(key, 2)
    images = jax.random.uniform(kimg, (2, 3, IMG_H, IMG_W), jnp.float32, 0.0, 255.0)
    params = init_params(kparam)
    gt_boxes = [
        jnp.asarray([[1.0, 2.0, 10.0, 12.0],
                     [4.0, 3.0, 15.0, 9.0],
                     [0.5, 0.5, 7.5, 7.5]], jnp.float32),
        jnp.asarray([[2.0, 2.0, 14.0, 14.0],
                     [6.0, 1.0, 12.0, 11.0]], jnp.float32),
    ]
    gt_classes = [jnp.asarray([3, 1, 7], jnp.int32), jnp.asarray([0, 5], jnp.int32)]

    fwd = jax.jit(diffdet_resnet_roi_pool_forward)
    box_features, classes = fwd(params, images, gt_boxes, gt_classes)
    box_features = jax.block_until_ready(box_features)
    assert box_features.shape == (5, C_OUT)
    assert box_features.dtype == jnp.float32
    assert len(classes) == 2
    print("KERNEL_OK")
</pallas_src>

<mosaic_0001>
module attributes {stable_mosaic.version = 11 : i64} {
  func.func @_backbone_kernel(%arg0: i32, %arg1: memref<128x32xbf16, #tpu.memory_space<vmem>>, %arg2: memref<32x64xbf16, #tpu.memory_space<vmem>>, %arg3: memref<1x64xf32, #tpu.memory_space<vmem>>, %arg4: memref<1x64xf32, #tpu.memory_space<vmem>>, %arg5: memref<576x128xbf16, #tpu.memory_space<vmem>>, %arg6: memref<1x128xf32, #tpu.memory_space<vmem>>, %arg7: memref<1x128xf32, #tpu.memory_space<vmem>>, %arg8: memref<128x128xf32, #tpu.memory_space<vmem>>, %arg9: memref<2x10x10x64xbf16, #tpu.memory_space<vmem>>) attributes {dimension_semantics = [#tpu.dimension_semantics<arbitrary>], iteration_bounds = array<i64: 1>, scalar_prefetch = 0 : i64, scratch_operands = 1 : i64, tpu.core_type = #tpu.core_type<tc>, window_params = [{pipeline_mode = #tpu.pipeline_mode<synchronous>, transform_indices = @transform_0, window_bounds = array<i64: 128, 32>}, {pipeline_mode = #tpu.pipeline_mode<synchronous>, transform_indices = @transform_1, window_bounds = array<i64: 32, 64>}, {pipeline_mode = #tpu.pipeline_mode<synchronous>, transform_indices = @transform_2, window_bounds = array<i64: 1, 64>}, {pipeline_mode = #tpu.pipeline_mode<synchronous>, transform_indices = @transform_3, window_bounds = array<i64: 1, 64>}, {pipeline_mode = #tpu.pipeline_mode<synchronous>, transform_indices = @transform_4, window_bounds = array<i64: 576, 128>}, {pipeline_mode = #tpu.pipeline_mode<synchronous>, transform_indices = @transform_5, window_bounds = array<i64: 1, 128>}, {pipeline_mode = #tpu.pipeline_mode<synchronous>, transform_indices = @transform_6, window_bounds = array<i64: 1, 128>}, {pipeline_mode = #tpu.pipeline_mode<synchronous>, transform_indices = @transform_7, window_bounds = array<i64: 128, 128>}]} {
    %c0 = arith.constant 0 : index
    %c0_0 = arith.constant 0 : index
    %0 = vector.load %arg1[%c0, %c0_0] : memref<128x32xbf16, #tpu.memory_space<vmem>>, vector<128x32xbf16>
    %c0_1 = arith.constant 0 : index
    %c0_2 = arith.constant 0 : index
    %1 = vector.load %arg2[%c0_1, %c0_2] : memref<32x64xbf16, #tpu.memory_space<vmem>>, vector<32x64xbf16>
    %cst = arith.constant dense<0.000000e+00> : vector<128x64xf32>
    %2 = tpu.matmul %0, %1, %cst {dimension_numbers = #tpu.dot_dimension_numbers<[1], [0], [0], [1], [0, 0, 1, 1], [], []>} : vector<128x32xbf16>, vector<32x64xbf16>, vector<128x64xf32> -> vector<128x64xf32>
    %c0_3 = arith.constant 0 : index
    %c0_4 = arith.constant 0 : index
    %3 = vector.load %arg3[%c0_3, %c0_4] : memref<1x64xf32, #tpu.memory_space<vmem>>, vector<1x64xf32>
    %4 = vector.broadcast %3 : vector<1x64xf32> to vector<128x64xf32>
    %5 = arith.mulf %2, %4 : vector<128x64xf32>
    %c0_5 = arith.constant 0 : index
    %c0_6 = arith.constant 0 : index
    %6 = vector.load %arg4[%c0_5, %c0_6] : memref<1x64xf32, #tpu.memory_space<vmem>>, vector<1x64xf32>
    %7 = vector.broadcast %6 : vector<1x64xf32> to vector<128x64xf32>
    %8 = arith.addf %5, %7 : vector<128x64xf32>
    %cst_7 = arith.constant 0.000000e+00 : f32
    %9 = vector.broadcast %cst_7 : f32 to vector<128x64xf32>
    %10 = arith.maximumf %8, %9 : vector<128x64xf32>
    %11 = arith.truncf %10 : vector<128x64xf32> to vector<128x64xbf16>
    %cst_8 = arith.constant 0.000000e+00 : bf16
    %12 = vector.broadcast %cst_8 : bf16 to vector<2x10x10x64xbf16>
    %c0_9 = arith.constant 0 : index
    %c0_10 = arith.constant 0 : index
    %c0_11 = arith.constant 0 : index
    %c0_12 = arith.constant 0 : index
    %13 = vector.load %arg9[%c0_9, %c0_10, %c0_11, %c0_12] : memref<2x10x10x64xbf16, #tpu.memory_space<vmem>>, vector<2x10x10x64xbf16>
    tpu.vector_store %arg9[%c0_9, %c0_10, %c0_11, %c0_12], %12 {strides = array<i32>} : memref<2x10x10x64xbf16, #tpu.memory_space<vmem>>, vector<2x10x10x64xbf16>,
    %14 = vector.shape_cast %11 : vector<128x64xbf16> to vector<2x8x8x64xbf16>
    %c0_13 = arith.constant 0 : index
    %c1 = arith.constant 1 : index
    %c1_14 = arith.constant 1 : index
    %c0_15 = arith.constant 0 : index
    %15 = vector.load %arg9[%c0_13, %c1, %c1_14, %c0_15] : memref<2x10x10x64xbf16, #tpu.memory_space<vmem>>, vector<2x8x8x64xbf16>
    tpu.vector_store %arg9[%c0_13, %c1, %c1_14, %c0_15], %14 {strides = array<i32>} : memref<2x10x10x64xbf16, #tpu.memory_space<vmem>>, vector<2x8x8x64xbf16>,
    %c0_16 = arith.constant 0 : index
    %c0_17 = arith.constant 0 : index
    %c0_18 = arith.constant 0 : index
    %c0_19 = arith.constant 0 : index
    %16 = vector.load %arg9[%c0_16, %c0_17, %c0_18, %c0_19] : memref<2x10x10x64xbf16, #tpu.memory_space<vmem>>, vector<2x8x8x64xbf16>
    %17 = vector.shape_cast %16 : vector<2x8x8x64xbf16> to vector<128x64xbf16>
    %c0_20 = arith.constant 0 : index
    %c0_21 = arith.constant 0 : index
    %c1_22 = arith.constant 1 : index
    %c0_23 = arith.constant 0 : index
    %18 = vector.load %arg9[%c0_20, %c0_21, %c1_22, %c0_23] : memref<2x10x10x64xbf16, #tpu.memory_space<vmem>>, vector<2x8x8x64xbf16>
    %19 = vector.shape_cast %18 : vector<2x8x8x64xbf16> to vector<128x64xbf16>
    %c0_24 = arith.constant 0 : index
    %c0_25 = arith.constant 0 : index
    %c2 = arith.constant 2 : index
    %c0_26 = arith.constant 0 : index
    %20 = vector.load %arg9[%c0_24, %c0_25, %c2, %c0_26] : memref<2x10x10x64xbf16, #tpu.memory_space<vmem>>, vector<2x8x8x64xbf16>
    %21 = vector.shape_cast %20 : vector<2x8x8x64xbf16> to vector<128x64xbf16>
    %c0_27 = arith.constant 0 : index
    %c1_28 = arith.constant 1 : index
    %c0_29 = arith.constant 0 : index
    %c0_30 = arith.constant 0 : index
    %22 = vector.load %arg9[%c0_27, %c1_28, %c0_29, %c0_30] : memref<2x10x10x64xbf16, #tpu.memory_space<vmem>>, vector<2x8x8x64xbf16>
    %23 = vector.shape_cast %22 : vector<2x8x8x64xbf16> to vector<128x64xbf16>
    %c0_31 = arith.constant 0 : index
    %c1_32 = arith.constant 1 : index
    %c1_33 = arith.constant 1 : index
    %c0_34 = arith.constant 0 : index
    %24 = vector.load %arg9[%c0_31, %c1_32, %c1_33, %c0_34] : memref<2x10x10x64xbf16, #tpu.memory_space<vmem>>, vector<2x8x8x64xbf16>
    %25 = vector.shape_cast %24 : vector<2x8x8x64xbf16> to vector<128x64xbf16>
    %c0_35 = arith.constant 0 : index
    %c1_36 = arith.constant 1 : index
    %c2_37 = arith.constant 2 : index
    %c0_38 = arith.constant 0 : index
    %26 = vector.load %arg9[%c0_35, %c1_36, %c2_37, %c0_38] : memref<2x10x10x64xbf16, #tpu.memory_space<vmem>>, vector<2x8x8x64xbf16>
    %27 = vector.shape_cast %26 : vector<2x8x8x64xbf16> to vector<128x64xbf16>
    %c0_39 = arith.constant 0 : index
    %c2_40 = arith.constant 2 : index
    %c0_41 = arith.constant 0 : index
    %c0_42 = arith.constant 0 : index
    %28 = vector.load %arg9[%c0_39, %c2_40, %c0_41, %c0_42] : memref<2x10x10x64xbf16, #tpu.memory_space<vmem>>, vector<2x8x8x64xbf16>
    %29 = vector.shape_cast %28 : vector<2x8x8x64xbf16> to vector<128x64xbf16>
    %c0_43 = arith.constant 0 : index
    %c2_44 = arith.constant 2 : index
    %c1_45 = arith.constant 1 : index
    %c0_46 = arith.constant 0 : index
    %30 = vector.load %arg9[%c0_43, %c2_44, %c1_45, %c0_46] : memref<2x10x10x64xbf16, #tpu.memory_space<vmem>>, vector<2x8x8x64xbf16>
    %31 = vector.shape_cast %30 : vector<2x8x8x64xbf16> to vector<128x64xbf16>
    %c0_47 = arith.constant 0 : index
    %c2_48 = arith.constant 2 : index
    %c2_49 = arith.constant 2 : index
    %c0_50 = arith.constant 0 : index
    %32 = vector.load %arg9[%c0_47, %c2_48, %c2_49, %c0_50] : memref<2x10x10x64xbf16, #tpu.memory_space<vmem>>, vector<2x8x8x64xbf16>
    %33 = vector.shape_cast %32 : vector<2x8x8x64xbf16> to vector<128x64xbf16>
    %34 = tpu.concatenate %17, %19, %21, %23, %25, %27, %29, %31, %33 in 1 : vector<128x64xbf16>, vector<128x64xbf16>, vector<128x64xbf16>, vector<128x64xbf16>, vector<128x64xbf16>, vector<128x64xbf16>, vector<128x64xbf16>, vector<128x64xbf16>, vector<128x64xbf16> -> vector<128x576xbf16>
    %c0_51 = arith.constant 0 : index
    %c0_52 = arith.constant 0 : index
    %35 = vector.load %arg5[%c0_51, %c0_52] : memref<576x128xbf16, #tpu.memory_space<vmem>>, vector<576x128xbf16>
    %cst_53 = arith.constant dense<0.000000e+00> : vector<128x128xf32>
    %36 = tpu.matmul %34, %35, %cst_53 {dimension_numbers = #tpu.dot_dimension_numbers<[1], [0], [0], [1], [0, 0, 1, 1], [], []>} : vector<128x576xbf16>, vector<576x128xbf16>, vector<128x128xf32> -> vector<128x128xf32>
    %c0_54 = arith.constant 0 : index
    %c0_55 = arith.constant 0 : index
    %37 = vector.load %arg6[%c0_54, %c0_55] : memref<1x128xf32, #tpu.memory_space<vmem>>, vector<1x128xf32>
    %38 = vector.broadcast %37 : vector<1x128xf32> to vector<128x128xf32>
    %39 = arith.mulf %36, %38 : vector<128x128xf32>
    %c0_56 = arith.constant 0 : index
    %c0_57 = arith.constant 0 : index
    %40 = vector.load %arg7[%c0_56, %c0_57] : memref<1x128xf32, #tpu.memory_space<vmem>>, vector<1x128xf32>
    %41 = vector.broadcast %40 : vector<1x128xf32> to vector<128x128xf32>
    %42 = arith.addf %39, %41 : vector<128x128xf32>
    %cst_58 = arith.constant 0.000000e+00 : f32
    %43 = vector.broadcast %cst_58 : f32 to vector<128x128xf32>
    %44 = arith.maximumf %42, %43 : vector<128x128xf32>
    %c0_59 = arith.constant 0 : index
    %c0_60 = arith.constant 0 : index
    %45 = vector.load %arg8[%c0_59, %c0_60] : memref<128x128xf32, #tpu.memory_space<vmem>>, vector<128x128xf32>
    tpu.vector_store %arg8[%c0_59, %c0_60], %44 {strides = array<i32>} : memref<128x128xf32, #tpu.memory_space<vmem>>, vector<128x128xf32>,
    return
  }
  func.func @transform_0(%arg0: i32) -> (i32, i32) {
    %c0_i32 = arith.constant 0 : i32
    %c0_i32_0 = arith.constant 0 : i32
    %c0_i32_1 = arith.constant 0 : i32
    return %c0_i32, %c0_i32_0 : i32, i32
  }
  func.func @transform_1(%arg0: i32) -> (i32, i32) {
    %c0_i32 = arith.constant 0 : i32
    %c0_i32_0 = arith.constant 0 : i32
    %c0_i32_1 = arith.constant 0 : i32
    return %c0_i32, %c0_i32_0 : i32, i32
  }
  func.func @transform_2(%arg0: i32) -> (i32, i32) {
    %c0_i32 = arith.constant 0 : i32
    %c0_i32_0 = arith.constant 0 : i32
    %c0_i32_1 = arith.constant 0 : i32
    return %c0_i32, %c0_i32_0 : i32, i32
  }
  func.func @transform_3(%arg0: i32) -> (i32, i32) {
    %c0_i32 = arith.constant 0 : i32
    %c0_i32_0 = arith.constant 0 : i32
    %c0_i32_1 = arith.constant 0 : i32
    return %c0_i32, %c0_i32_0 : i32, i32
  }
  func.func @transform_4(%arg0: i32) -> (i32, i32) {
    %c0_i32 = arith.constant 0 : i32
    %c0_i32_0 = arith.constant 0 : i32
    %c0_i32_1 = arith.constant 0 : i32
    return %c0_i32, %c0_i32_0 : i32, i32
  }
  func.func @transform_5(%arg0: i32) -> (i32, i32) {
    %c0_i32 = arith.constant 0 : i32
    %c0_i32_0 = arith.constant 0 : i32
    %c0_i32_1 = arith.constant 0 : i32
    return %c0_i32, %c0_i32_0 : i32, i32
  }
  func.func @transform_6(%arg0: i32) -> (i32, i32) {
    %c0_i32 = arith.constant 0 : i32
    %c0_i32_0 = arith.constant 0 : i32
    %c0_i32_1 = arith.constant 0 : i32
    return %c0_i32, %c0_i32_0 : i32, i32
  }
  func.func @transform_7(%arg0: i32) -> (i32, i32) {
    %c0_i32 = arith.constant 0 : i32
    %c0_i32_0 = arith.constant 0 : i32
    %c0_i32_1 = arith.constant 0 : i32
    return %c0_i32, %c0_i32_0 : i32, i32
  }
}

module attributes {stable_mosaic.version = 11 : i64} {
  func.func @_roi_pool_kernel(%arg0: i32, %arg1: memref<5x128xf32, #tpu.memory_space<vmem>>, %arg2: memref<128x128xf32, #tpu.memory_space<vmem>>, %arg3: memref<5x128xf32, #tpu.memory_space<vmem>>) attributes {dimension_semantics = [#tpu.dimension_semantics<arbitrary>], iteration_bounds = array<i64: 1>, scalar_prefetch = 0 : i64, scratch_operands = 0 : i64, tpu.core_type = #tpu.core_type<tc>, window_params = [{pipeline_mode = #tpu.pipeline_mode<synchronous>, transform_indices = @transform_0, window_bounds = array<i64: 5, 128>}, {pipeline_mode = #tpu.pipeline_mode<synchronous>, transform_indices = @transform_1, window_bounds = array<i64: 128, 128>}, {pipeline_mode = #tpu.pipeline_mode<synchronous>, transform_indices = @transform_2, window_bounds = array<i64: 5, 128>}]} {
    %c0 = arith.constant 0 : index
    %c0_0 = arith.constant 0 : index
    %0 = vector.load %arg1[%c0, %c0_0] : memref<5x128xf32, #tpu.memory_space<vmem>>, vector<5x128xf32>
    %c0_1 = arith.constant 0 : index
    %c0_2 = arith.constant 0 : index
    %1 = vector.load %arg2[%c0_1, %c0_2] : memref<128x128xf32, #tpu.memory_space<vmem>>, vector<128x128xf32>
    %cst = arith.constant dense<0.000000e+00> : vector<5x128xf32>
    %2 = tpu.matmul %0, %1, %cst {dimension_numbers = #tpu.dot_dimension_numbers<[1], [0], [0], [1], [0, 0, 1, 1], [], []>} : vector<5x128xf32>, vector<128x128xf32>, vector<5x128xf32> -> vector<5x128xf32>
    %c0_3 = arith.constant 0 : index
    %c0_4 = arith.constant 0 : index
    %3 = vector.load %arg3[%c0_3, %c0_4] : memref<5x128xf32, #tpu.memory_space<vmem>>, vector<5x128xf32>
    tpu.vector_store %arg3[%c0_3, %c0_4], %2 {strides = array<i32>} : memref<5x128xf32, #tpu.memory_space<vmem>>, vector<5x128xf32>,
    return
  }
  func.func @transform_0(%arg0: i32) -> (i32, i32) {
    %c0_i32 = arith.constant 0 : i32
    %c0_i32_0 = arith.constant 0 : i32
    %c0_i32_1 = arith.constant 0 : i32
    return %c0_i32, %c0_i32_0 : i32, i32
  }
  func.func @transform_1(%arg0: i32) -> (i32, i32) {
    %c0_i32 = arith.constant 0 : i32
    %c0_i32_0 = arith.constant 0 : i32
    %c0_i32_1 = arith.constant 0 : i32
    return %c0_i32, %c0_i32_0 : i32, i32
  }
  func.func @transform_2(%arg0: i32) -> (i32, i32) {
    %c0_i32 = arith.constant 0 : i32
    %c0_i32_0 = arith.constant 0 : i32
    %c0_i32_1 = arith.constant 0 : i32
    return %c0_i32, %c0_i32_0 : i32, i32
  }
}

</mosaic_0001>

<llo_original>
// kernel: diffdet_resnet_roi_pool_forward.3
$region0: #{diffdet_resnet_roi_pool_forward.3}
  #allocation0 [shape = 'u32[]', space=smem, size = 0x4, offset = 0x4, fixed_abs, tag = 'smem constant byte address 0x4 - core index']
  #allocation1 [shape = 'u32[72,128]{1,0:T(1,128)}', space=vmem, size = 0x9000, scoped, tag = 'internal scratch']
  %s0 = inlined_call_operand.vmem [shape: f32[5,128], index: 0, kind: input, shape index: {}]
  %s1 = inlined_call_operand.vmem [shape: f32[128,128], index: 1, kind: input, shape index: {}]
  %s2 = inlined_call_operand.hbm [shape: f32[5,128], index: 2, kind: output, shape index: {}]
  %s3 = sld [smem:[#allocation0]]
  $region18: #{diffdet_resnet_roi_pool_forward.3} parent=0
    _
  %s5 = ssub.s32 1, %s3
  %s6 = scalar_select 0, %s5, %s3
  $region1: #{diffdet_resnet_roi_pool_forward.3} parent=0
    #allocation2 [shape = 'u8[4096]{0}', space=vmem, size = 0x1000, scoped, tag = 'output window, operand 0, single buffered']
    #allocation3 [shape = 's32[1]{0}', space=sflag, size = 0x4, scoped, tag = 'scoped memory for diffdet_resnet_roi_pool_forward.3']
    %7 = vsyncpa [#allocation3], 0
    // Predicated region
    $region2: #{diffdet_resnet_roi_pool_forward.3} parent=1 // pred_check
      _
    $region3: #{diffdet_resnet_roi_pool_forward.3} parent=1 // pred_check_branch
      %9 = sbr.rel (0) target = $region5
    $region4: #{diffdet_resnet_roi_pool_forward.3} parent=1 // pred_region
      _
    $region5: #{diffdet_resnet_roi_pool_forward.3} parent=1 // pred_fallthru
      _
    // Predicated region
    $region6: #{diffdet_resnet_roi_pool_forward.3} parent=1 // pred_check
      _
    $region7: #{diffdet_resnet_roi_pool_forward.3} parent=1 // pred_check_branch
      %11 = sbr.rel (0) target = $region9
    $region8: #{diffdet_resnet_roi_pool_forward.3} parent=1 // pred_region
      _
    $region9: #{diffdet_resnet_roi_pool_forward.3} parent=1 // pred_fallthru
      _
    %v12 = vld [vmem:[%s0] sm:$0x1f]
    %v13 = vld [vmem:[%s1] sm:$0xff]
    %v14 = vld [vmem:[%s1 + $0x8] sm:$0xff]
    %v15 = vld [vmem:[%s1 + $0x10] sm:$0xff]
    %v16 = vld [vmem:[%s1 + $0x18] sm:$0xff]
    %v17 = vld [vmem:[%s1 + $0x20] sm:$0xff]
    %v18 = vld [vmem:[%s1 + $0x28] sm:$0xff]
    %v19 = vld [vmem:[%s1 + $0x30] sm:$0xff]
    %v20 = vld [vmem:[%s1 + $0x38] sm:$0xff]
    %v21 = vld [vmem:[%s1 + $0x40] sm:$0xff]
    %v22 = vld [vmem:[%s1 + $0x48] sm:$0xff]
    %v23 = vld [vmem:[%s1 + $0x50] sm:$0xff]
    %v24 = vld [vmem:[%s1 + $0x58] sm:$0xff]
    %v25 = vld [vmem:[%s1 + $0x60] sm:$0xff]
    %v26 = vld [vmem:[%s1 + $0x68] sm:$0xff]
    %v27 = vld [vmem:[%s1 + $0x70] sm:$0xff]
    %v28 = vld [vmem:[%s1 + $0x78] sm:$0xff]
    %29 = vmatpush.msra.mxu0 %v28
    %30 = vmatpush.msra.mxu0 %v27
    %31 = vmatpush.msra.mxu0 %v26
    %32 = vmatpush.msra.mxu0 %v25
    %33 = vmatpush.msra.mxu0 %v24
    %34 = vmatpush.msra.mxu0 %v23
    %35 = vmatpush.msra.mxu0 %v22
    %36 = vmatpush.msra.mxu0 %v21
    %37 = vmatpush.msra.mxu0 %v20
    %38 = vmatpush.msra.mxu0 %v19
    %39 = vmatpush.msra.mxu0 %v18
    %40 = vmatpush.msra.mxu0 %v17
    %41 = vmatpush.msra.mxu0 %v16
    %42 = vmatpush.msra.mxu0 %v15
    %43 = vmatpush.msra.mxu0 %v14
    %44 = vmatpush.msra.mxu0 %v13
    %45 = vmatmul.f32.gmra.mxu0 %v12
    %v46 = vpop.f32.mrf.mxu0
    %v47 = vadd.f32 0.0, %v46
    %48 = vdwg.mxu0
    %49 = vst [vmem:[#allocation2] sm:$0x1f] %v47
    // Predicated region
    $region10: #{diffdet_resnet_roi_pool_forward.3} parent=1 // pred_check
      _
    $region11: #{diffdet_resnet_roi_pool_forward.3} parent=1 // pred_check_branch
      %51 = sbr.rel (0) target = $region13
    $region12: #{diffdet_resnet_roi_pool_forward.3} parent=1 // pred_region
      %53 = vsyncadd [#allocation3], 0
      %s55 = sshll.u32 [#allocation2], 4
      %s56 = int_to_ptr.vmem [resolvable:$true] %s55
      %s57 = sshll.u32 %s2, 4
      %s58 = int_to_ptr.hbm [resolvable:$true] %s57
      %60 = dma.vmem_to_hbm [thread:$0]  %s56, 128, %s58, [#allocation3]
    $region13: #{diffdet_resnet_roi_pool_forward.3} parent=1 // pred_fallthru
      _
    // Predicated region
    $region14: #{diffdet_resnet_roi_pool_forward.3} parent=1 // pred_check
      _
    $region15: #{diffdet_resnet_roi_pool_forward.3} parent=1 // pred_check_branch
      %62 = sbr.rel (0) target = $region17
    $region16: #{diffdet_resnet_roi_pool_forward.3} parent=1 // pred_region
      %64 = dma.done [#allocation3], 128
    $region17: #{diffdet_resnet_roi_pool_forward.3} parent=1 // pred_fallthru
      _
    %65 = vsyncpa [#allocation3], 1

// kernel: diffdet_resnet_roi_pool_forward.2
$region0: #{diffdet_resnet_roi_pool_forward.2}
  #allocation0 [shape = 'u32[]', space=smem, size = 0x4, offset = 0x4, fixed_abs, tag = 'smem constant byte address 0x4 - core index']
  #allocation1 [shape = 'u32[72,128]{1,0:T(1,128)}', space=vmem, size = 0x9000, scoped, tag = 'internal scratch']
  #allocation2 [shape = 'bf16[2,10,10,64]{3,2,1,0:T(8,128)(2,1)}', space=vmem, size = 0x14000, scoped, tag = 'scratch operand']
  %s0 = inlined_call_operand.vmem [shape: bf16[128,32], index: 0, kind: input, shape index: {}]
  %s1 = inlined_call_operand.vmem [shape: bf16[32,64], index: 1, kind: input, shape index: {}]
  %s2 = inlined_call_operand.vmem [shape: f32[1,64], index: 2, kind: input, shape index: {}]
  %s3 = inlined_call_operand.vmem [shape: f32[1,64], index: 3, kind: input, shape index: {}]
  %s4 = inlined_call_operand.vmem [shape: bf16[576,128], index: 4, kind: input, shape index: {}]
  %s5 = inlined_call_operand.vmem [shape: f32[1,128], index: 5, kind: input, shape index: {}]
  %s6 = inlined_call_operand.vmem [shape: f32[1,128], index: 6, kind: input, shape index: {}]
  %s7 = inlined_call_operand.vmem [shape: f32[128,128], index: 7, kind: output, shape index: {}]
  %s8 = sld [smem:[#allocation0]]
  $region38: #{diffdet_resnet_roi_pool_forward.2} parent=0
    _
  %s10 = ssub.s32 1, %s8
  %s11 = scalar_select 0, %s10, %s8
  // Predicated region
  $region2: #{diffdet_resnet_roi_pool_forward.2} parent=0 // pred_check
    _
  $region3: #{diffdet_resnet_roi_pool_forward.2} parent=0 // pred_check_branch
    %13 = sbr.rel (0) target = $region5
  $region4: #{diffdet_resnet_roi_pool_forward.2} parent=0 // pred_region
    _
  $region5: #{diffdet_resnet_roi_pool_forward.2} parent=0 // pred_fallthru
    _
  // Predicated region
  $region6: #{diffdet_resnet_roi_pool_forward.2} parent=0 // pred_check
    _
  $region7: #{diffdet_resnet_roi_pool_forward.2} parent=0 // pred_check_branch
    %15 = sbr.rel (0) target = $region9
  $region8: #{diffdet_resnet_roi_pool_forward.2} parent=0 // pred_region
    _
  $region9: #{diffdet_resnet_roi_pool_forward.2} parent=0 // pred_fallthru
    _
  // Predicated region
  $region10: #{diffdet_resnet_roi_pool_forward.2} parent=0 // pred_check
    _
  $region11: #{diffdet_resnet_roi_pool_forward.2} parent=0 // pred_check_branch
    %17 = sbr.rel (0) target = $region13
  $region12: #{diffdet_resnet_roi_pool_forward.2} parent=0 // pred_region
    _
  $region13: #{diffdet_resnet_roi_pool_forward.2} parent=0 // pred_fallthru
    _
  // Predicated region
  $region14: #{diffdet_resnet_roi_pool_forward.2} parent=0 // pred_check
    _
  $region15: #{diffdet_resnet_roi_pool_forward.2} parent=0 // pred_check_branch
    %19 = sbr.rel (0) target = $region17
  $region16: #{diffdet_resnet_roi_pool_forward.2} parent=0 // pred_region
    _
  $region17: #{diffdet_resnet_roi_pool_forward.2} parent=0 // pred_fallthru
    _
  // Predicated region
  $region18: #{diffdet_resnet_roi_pool_forward.2} parent=0 // pred_check
    _
  $region19: #{diffdet_resnet_roi_pool_forward.2} parent=0 // pred_check_branch
    %21 = sbr.rel (0) target = $region21
  $region20: #{diffdet_resnet_roi_pool_forward.2} parent=0 // pred_region
    _
  $region21: #{diffdet_resnet_roi_pool_forward.2} parent=0 // pred_fallthru
    _
  // Predicated region
  $region22: #{diffdet_resnet_roi_pool_forward.2} parent=0 // pred_check
    _
  $region23: #{diffdet_resnet_roi_pool_forward.2} parent=0 // pred_check_branch
    %23 = sbr.rel (0) target = $region25
  $region24: #{diffdet_resnet_roi_pool_forward.2} parent=0 // pred_region
    _
  $region25: #{diffdet_resnet_roi_pool_forward.2} parent=0 // pred_fallthru
    _
  // Predicated region
  $region26: #{diffdet_resnet_roi_pool_forward.2} parent=0 // pred_check
    _
  $region27: #{diffdet_resnet_roi_pool_forward.2} parent=0 // pred_check_branch
    %25 = sbr.rel (0) target = $region29
  $region28: #{diffdet_resnet_roi_pool_forward.2} parent=0 // pred_region
    _
  $region29: #{diffdet_resnet_roi_pool_forward.2} parent=0 // pred_fallthru
    _
  %v27 = vld [vmem:[%s0] sm:$0xf]
  %v28 = vld [vmem:[%s0 + $0x4] sm:$0xf]
  %v29 = vld [vmem:[%s0 + $0x8] sm:$0xf]
  %v30 = vld [vmem:[%s0 + $0xc] sm:$0xf]
  %v31 = vld [vmem:[%s0 + $0x10] sm:$0xf]
  %v32 = vld [vmem:[%s0 + $0x14] sm:$0xf]
  %v33 = vld [vmem:[%s0 + $0x18] sm:$0xf]
  %v34 = vld [vmem:[%s0 + $0x1c] sm:$0xf]
  %v35 = vld [vmem:[%s0 + $0x20] sm:$0xf]
  %v36 = vld [vmem:[%s0 + $0x24] sm:$0xf]
  %v37 = vld [vmem:[%s0 + $0x28] sm:$0xf]
  %v38 = vld [vmem:[%s0 + $0x2c] sm:$0xf]
  %v39 = vld [vmem:[%s0 + $0x30] sm:$0xf]
  %v40 = vld [vmem:[%s0 + $0x34] sm:$0xf]
  %v41 = vld [vmem:[%s0 + $0x38] sm:$0xf]
  %v42 = vld [vmem:[%s0 + $0x3c] sm:$0xf]
  %v43 = vld [vmem:[%s1] sm:$0xf]
  %v44 = vld [vmem:[%s1 + $0x4] sm:$0xf]
  %v45 = vld [vmem:[%s1 + $0x8] sm:$0xf]
  %v46 = vld [vmem:[%s1 + $0xc] sm:$0xf]
  %v63 = vunpack.c.l.b16 %v27
  %v64 = vunpack.c.l.b16 %v28
  %v65 = vunpack.c.l.b16 %v29
  %v66 = vunpack.c.l.b16 %v30
  %v67 = vunpack.c.l.b16 %v31
  %v68 = vunpack.c.l.b16 %v32
  %v69 = vunpack.c.l.b16 %v33
  %v70 = vunpack.c.l.b16 %v34
  %v71 = vunpack.c.l.b16 %v35
  %v72 = vunpack.c.l.b16 %v36
  %v73 = vunpack.c.l.b16 %v37
  %v74 = vunpack.c.l.b16 %v38
  %v75 = vunpack.c.l.b16 %v39
  %v76 = vunpack.c.l.b16 %v40
  %v77 = vunpack.c.l.b16 %v41
  %v78 = vunpack.c.l.b16 %v42
  %v79 = vpack.c.b16 %v64, %v63
  %v80 = vpack.c.b16 %v66, %v65
  %v81 = vpack.c.b16 %v68, %v67
  %v82 = vpack.c.b16 %v70, %v69
  %v83 = vpack.c.b16 %v72, %v71
  %v84 = vpack.c.b16 %v74, %v73
  %v85 = vpack.c.b16 %v76, %v75
  %v86 = vpack.c.b16 %v78, %v77
  %v91 = vunpack.c.l.b16 %v43
  %v92 = vunpack.c.l.b16 %v44
  %v93 = vunpack.c.l.b16 %v45
  %v94 = vunpack.c.l.b16 %v46
  %v95 = vpack.c.b16 %v92, %v91
  %v96 = vpack.c.b16 %v94, %v93
  %vm99 = vcmask 261120
  %v101 = vsel %vm99, %v79, 0
  %v104 = vsel %vm99, %v80, 0
  %v107 = vsel %vm99, %v81, 0
  %v110 = vsel %vm99, %v82, 0
  %v113 = vsel %vm99, %v83, 0
  %v116 = vsel %vm99, %v84, 0
  %v119 = vsel %vm99, %v85, 0
  %v122 = vsel %vm99, %v86, 0
  %124 = vmatpush.bf16.msra.mxu0 0
  %125 = vmatpush.bf16.msra.mxu0 0
  %126 = vmatpush.bf16.msra.mxu0 0
  %127 = vmatpush.bf16.msra.mxu0 0
  %128 = vmatpush.bf16.msra.mxu0 0
  %129 = vmatpush.bf16.msra.mxu0 0
  %130 = vmatpush.bf16.msra.mxu0 %v96
  %131 = vmatpush.bf16.msra.mxu0 %v95
  %132 = vmatmul.bf16.gmra.mxu0 %v101
  %v133 = vpop.f32.mrf.mxu0
  %v134 = vadd.f32 0.0, %v133
  %v135 = vpop.f32.mrf.mxu0
  %v136 = vadd.f32 0.0, %v135
  %137 = vmatmul.bf16.gmra.mxu0 %v104
  %v138 = vpop.f32.mrf.mxu0
  %v139 = vadd.f32 0.0, %v138
  %v140 = vpop.f32.mrf.mxu0
  %v141 = vadd.f32 0.0, %v140
  %142 = vmatmul.bf16.gmra.mxu0 %v107
  %v143 = vpop.f32.mrf.mxu0
  %v144 = vadd.f32 0.0, %v143
  %v145 = vpop.f32.mrf.mxu0
  %v146 = vadd.f32 0.0, %v145
  %147 = vmatmul.bf16.gmra.mxu0 %v110
  %v148 = vpop.f32.mrf.mxu0
  %v149 = vadd.f32 0.0, %v148
  %v150 = vpop.f32.mrf.mxu0
  %v151 = vadd.f32 0.0, %v150
  %152 = vmatmul.bf16.gmra.mxu0 %v113
  %v153 = vpop.f32.mrf.mxu0
  %v154 = vadd.f32 0.0, %v153
  %v155 = vpop.f32.mrf.mxu0
  %v156 = vadd.f32 0.0, %v155
  %157 = vmatmul.bf16.gmra.mxu0 %v116
  %v158 = vpop.f32.mrf.mxu0
  %v159 = vadd.f32 0.0, %v158
  %v160 = vpop.f32.mrf.mxu0
  %v161 = vadd.f32 0.0, %v160
  %162 = vmatmul.bf16.gmra.mxu0 %v119
  %v163 = vpop.f32.mrf.mxu0
  %v164 = vadd.f32 0.0, %v163
  %v165 = vpop.f32.mrf.mxu0
  %v166 = vadd.f32 0.0, %v165
  %167 = vmatmul.bf16.gmra.mxu0 %v122
  %v168 = vpop.f32.mrf.mxu0
  %v169 = vadd.f32 0.0, %v168
  %v170 = vpop.f32.mrf.mxu0
  %v171 = vadd.f32 0.0, %v170
  %172 = vdwg.mxu0
  %v173 = vld [vmem:[%s2] sm:$0x1]
  %v175 = vperm.slane %v173, 0
  %v177 = vmul.f32 %v134, %v175
  %v178 = vmul.f32 %v136, %v175
  %v179 = vmul.f32 %v139, %v175
  %v180 = vmul.f32 %v141, %v175
  %v181 = vmul.f32 %v144, %v175
  %v182 = vmul.f32 %v146, %v175
  %v183 = vmul.f32 %v149, %v175
  %v184 = vmul.f32 %v151, %v175
  %v185 = vmul.f32 %v154, %v175
  %v186 = vmul.f32 %v156, %v175
  %v187 = vmul.f32 %v159, %v175
  %v188 = vmul.f32 %v161, %v175
  %v189 = vmul.f32 %v164, %v175
  %v190 = vmul.f32 %v166, %v175
  %v191 = vmul.f32 %v169, %v175
  %v192 = vmul.f32 %v171, %v175
  %v193 = vld [vmem:[%s3] sm:$0x1]
  %v195 = vperm.slane %v193, 0
  %v197 = vadd.f32 %v177, %v195
  %v198 = vadd.f32 %v178, %v195
  %v199 = vadd.f32 %v179, %v195
  %v200 = vadd.f32 %v180, %v195
  %v201 = vadd.f32 %v181, %v195
  %v202 = vadd.f32 %v182, %v195
  %v203 = vadd.f32 %v183, %v195
  %v204 = vadd.f32 %v184, %v195
  %v205 = vadd.f32 %v185, %v195
  %v206 = vadd.f32 %v186, %v195
  %v207 = vadd.f32 %v187, %v195
  %v208 = vadd.f32 %v188, %v195
  %v209 = vadd.f32 %v189, %v195
  %v210 = vadd.f32 %v190, %v195
  %v211 = vadd.f32 %v191, %v195
  %v212 = vadd.f32 %v192, %v195
  %v213 = vmax.f32 %v197, 0.0
  %v214 = vmax.f32 %v198, 0.0
  %v215 = vmax.f32 %v199, 0.0
  %v216 = vmax.f32 %v200, 0.0
  %v217 = vmax.f32 %v201, 0.0
  %v218 = vmax.f32 %v202, 0.0
  %v219 = vmax.f32 %v203, 0.0
  %v220 = vmax.f32 %v204, 0.0
  %v221 = vmax.f32 %v205, 0.0
  %v222 = vmax.f32 %v206, 0.0
  %v223 = vmax.f32 %v207, 0.0
  %v224 = vmax.f32 %v208, 0.0
  %v225 = vmax.f32 %v209, 0.0
  %v226 = vmax.f32 %v210, 0.0
  %v227 = vmax.f32 %v211, 0.0
  %v228 = vmax.f32 %v212, 0.0
  %v229 = vpack.c.bf16 %v213, %v213
  %v230 = vpack.c.bf16 %v214, %v214
  %v231 = vpack.c.bf16 %v215, %v215
  %v232 = vpack.c.bf16 %v216, %v216
  %v233 = vpack.c.bf16 %v217, %v217
  %v234 = vpack.c.bf16 %v218, %v218
  %v235 = vpack.c.bf16 %v219, %v219
  %v236 = vpack.c.bf16 %v220, %v220
  %v237 = vpack.c.bf16 %v221, %v221
  %v238 = vpack.c.bf16 %v222, %v222
  %v239 = vpack.c.bf16 %v223, %v223
  %v240 = vpack.c.bf16 %v224, %v224
  %v241 = vpack.c.bf16 %v225, %v225
  %v242 = vpack.c.bf16 %v226, %v226
  %v243 = vpack.c.bf16 %v227, %v227
  %v244 = vpack.c.bf16 %v228, %v228
  %vm245 = vcmask 519168
  %246 = vst.msk [vmem:[#allocation2] sm:$0xf] %vm245, 0
  %vm247 = vcmask 516096
  %248 = vst.msk [vmem:[#allocation2 + $0x4] sm:$0x1] %vm247, 0
  %249 = vst.msk [vmem:[#allocation2 + $0x8] sm:$0xf] %vm245, 0
  %250 = vst.msk [vmem:[#allocation2 + $0xc] sm:$0x1] %vm247, 0
  %251 = vst.msk [vmem:[#allocation2 + $0x10] sm:$0xf] %vm245, 0
  %252 = vst.msk [vmem:[#allocation2 + $0x14] sm:$0x1] %vm247, 0
  %253 = vst.msk [vmem:[#allocation2 + $0x18] sm:$0xf] %vm245, 0
  %254 = vst.msk [vmem:[#allocation2 + $0x1c] sm:$0x1] %vm247, 0
  %255 = vst.msk [vmem:[#allocation2 + $0x20] sm:$0xf] %vm245, 0
  %256 = vst.msk [vmem:[#allocation2 + $0x24] sm:$0x1] %vm247, 0
  %257 = vst.msk [vmem:[#allocation2 + $0x28] sm:$0xf] %vm245, 0
  %258 = vst.msk [vmem:[#allocation2 + $0x2c] sm:$0x1] %vm247, 0
  %259 = vst.msk [vmem:[#allocation2 + $0x30] sm:$0xf] %vm245, 0
  %260 = vst.msk [vmem:[#allocation2 + $0x34] sm:$0x1] %vm247, 0
  %261 = vst.msk [vmem:[#allocation2 + $0x38] sm:$0xf] %vm245, 0
  %262 = vst.msk [vmem:[#allocation2 + $0x3c] sm:$0x1] %vm247, 0
  %263 = vst.msk [vmem:[#allocation2 + $0x40] sm:$0xf] %vm245, 0
  %264 = vst.msk [vmem:[#allocation2 + $0x44] sm:$0x1] %vm247, 0
  %265 = vst.msk [vmem:[#allocation2 + $0x48] sm:$0xf] %vm245, 0
  %266 = vst.msk [vmem:[#allocation2 + $0x4c] sm:$0x1] %vm247, 0
  %267 = vst.msk [vmem:[#allocation2 + $0x50] sm:$0xf] %vm245, 0
  %268 = vst.msk [vmem:[#allocation2 + $0x54] sm:$0x1] %vm247, 0
  %269 = vst.msk [vmem:[#allocation2 + $0x58] sm:$0xf] %vm245, 0
  %270 = vst.msk [vmem:[#allocation2 + $0x5c] sm:$0x1] %vm247, 0
  %271 = vst.msk [vmem:[#allocation2 + $0x60] sm:$0xf] %vm245, 0
  %272 = vst.msk [vmem:[#allocation2 + $0x64] sm:$0x1] %vm247, 0
  %273 = vst.msk [vmem:[#allocation2 + $0x68] sm:$0xf] %vm245, 0
  %274 = vst.msk [vmem:[#allocation2 + $0x6c] sm:$0x1] %vm247, 0
  %275 = vst.msk [vmem:[#allocation2 + $0x70] sm:$0xf] %vm245, 0
  %276 = vst.msk [vmem:[#allocation2 + $0x74] sm:$0x1] %vm247, 0
  %277 = vst.msk [vmem:[#allocation2 + $0x78] sm:$0xf] %vm245, 0
  %278 = vst.msk [vmem:[#allocation2 + $0x7c] sm:$0x1] %vm247, 0
  %279 = vst.msk [vmem:[#allocation2 + $0x80] sm:$0xf] %vm245, 0
  %280 = vst.msk [vmem:[#allocation2 + $0x84] sm:$0x1] %vm247, 0
  %281 = vst.msk [vmem:[#allocation2 + $0x88] sm:$0xf] %vm245, 0
  %282 = vst.msk [vmem:[#allocation2 + $0x8c] sm:$0x1] %vm247, 0
  %283 = vst.msk [vmem:[#allocation2 + $0x90] sm:$0xf] %vm245, 0
  %284 = vst.msk [vmem:[#allocation2 + $0x94] sm:$0x1] %vm247, 0
  %285 = vst.msk [vmem:[#allocation2 + $0x98] sm:$0xf] %vm245, 0
  %286 = vst.msk [vmem:[#allocation2 + $0x9c] sm:$0x1] %vm247, 0
  %v288 = vshrl.u32 %v229, 16
  %v290 = vrot.slane %v288, 7
  %v291 = vshll.u32 %v229, 16
  %v293 = vor.u32 %v290, %v291
  %v294 = vrot.slane %v290, 4
  %v296 = vshrl.u32 %v230, 16
  %v298 = vrot.slane %v296, 7
  %v299 = vshll.u32 %v230, 16
  %v301 = vor.u32 %v298, %v299
  %v302 = vrot.slane %v298, 4
  %v304 = vshrl.u32 %v231, 16
  %v306 = vrot.slane %v304, 7
  %v307 = vshll.u32 %v231, 16
  %v309 = vor.u32 %v306, %v307
  %v310 = vrot.slane %v306, 4
  %v312 = vshrl.u32 %v232, 16
  %v314 = vrot.slane %v312, 7
  %v315 = vshll.u32 %v232, 16
  %v317 = vor.u32 %v314, %v315
  %v318 = vrot.slane %v314, 4
  %v320 = vshrl.u32 %v233, 16
  %v322 = vrot.slane %v320, 7
  %v323 = vshll.u32 %v233, 16
  %v325 = vor.u32 %v322, %v323
  %v326 = vrot.slane %v322, 4
  %v328 = vshrl.u32 %v234, 16
  %v330 = vrot.slane %v328, 7
  %v331 = vshll.u32 %v234, 16
  %v333 = vor.u32 %v330, %v331
  %v334 = vrot.slane %v330, 4
  %v336 = vshrl.u32 %v235, 16
  %v338 = vrot.slane %v336, 7
  %v339 = vshll.u32 %v235, 16
  %v341 = vor.u32 %v338, %v339
  %v342 = vrot.slane %v338, 4
  %v344 = vshrl.u32 %v236, 16
  %v346 = vrot.slane %v344, 7
  %v347 = vshll.u32 %v236, 16
  %v349 = vor.u32 %v346, %v347
  %v350 = vrot.slane %v346, 4
  %v352 = vshrl.u32 %v237, 16
  %v354 = vrot.slane %v352, 7
  %v355 = vshll.u32 %v237, 16
  %v357 = vor.u32 %v354, %v355
  %v358 = vrot.slane %v354, 4
  %v360 = vshrl.u32 %v238, 16
  %v362 = vrot.slane %v360, 7
  %v363 = vshll.u32 %v238, 16
  %v365 = vor.u32 %v362, %v363
  %v366 = vrot.slane %v362, 4
  %v368 = vshrl.u32 %v239, 16
  %v370 = vrot.slane %v368, 7
  %v371 = vshll.u32 %v239, 16
  %v373 = vor.u32 %v370, %v371
  %v374 = vrot.slane %v370, 4
  %v376 = vshrl.u32 %v240, 16
  %v378 = vrot.slane %v376, 7
  %v379 = vshll.u32 %v240, 16
  %v381 = vor.u32 %v378, %v379
  %v382 = vrot.slane %v378, 4
  %v384 = vshrl.u32 %v241, 16
  %v386 = vrot.slane %v384, 7
  %v387 = vshll.u32 %v241, 16
  %v389 = vor.u32 %v386, %v387
  %v390 = vrot.slane %v386, 4
  %v392 = vshrl.u32 %v242, 16
  %v394 = vrot.slane %v392, 7
  %v395 = vshll.u32 %v242, 16
  %v397 = vor.u32 %v394, %v395
  %v398 = vrot.slane %v394, 4
  %v400 = vshrl.u32 %v243, 16
  %v402 = vrot.slane %v400, 7
  %v403 = vshll.u32 %v243, 16
  %v405 = vor.u32 %v402, %v403
  %v406 = vrot.slane %v402, 4
  %v408 = vshrl.u32 %v244, 16
  %v410 = vrot.slane %v408, 7
  %v411 = vshll.u32 %v244, 16
  %v413 = vor.u32 %v410, %v411
  %v414 = vrot.slane %v410, 4
  %s447 = scalar_lea.vmem [#allocation2], 8
  %vm448 = vcmask 519168
  %vm449 = vsmask.f32 7938
  %vm450 = vmand %vm448, %vm449
  %v451 = vld [vmem:[%s447] sm:$0xf]
  %v452 = vsel %vm450, %v293, %v451
  %453 = vst [vmem:[%s447] sm:$0xf] %v452
  %vm454 = vcmask 516096
  %vm455 = vsmask.f32 256
  %vm456 = vmand %vm454, %vm455
  %v457 = vld [vmem:[%s447 + $0x4] sm:$0x1]
  %v458 = vsel %vm456, %v294, %v457
  %459 = vst [vmem:[%s447 + $0x4] sm:$0x1] %v458
  %v460 = vld [vmem:[%s447 + $0x8] sm:$0xf]
  %v461 = vsel %vm450, %v301, %v460
  %462 = vst [vmem:[%s447 + $0x8] sm:$0xf] %v461
  %v463 = vld [vmem:[%s447 + $0xc] sm:$0x1]
  %v464 = vsel %vm456, %v302, %v463
  %465 = vst [vmem:[%s447 + $0xc] sm:$0x1] %v464
  %v466 = vld [vmem:[%s447 + $0x10] sm:$0xf]
  %v467 = vsel %vm450, %v309, %v466
  %468 = vst [vmem:[%s447 + $0x10] sm:$0xf] %v467
  %v469 = vld [vmem:[%s447 + $0x14] sm:$0x1]
  %v470 = vsel %vm456, %v310, %v469
  %471 = vst [vmem:[%s447 + $0x14] sm:$0x1] %v470
  %v472 = vld [vmem:[%s447 + $0x18] sm:$0xf]
  %v473 = vsel %vm450, %v317, %v472
  %474 = vst [vmem:[%s447 + $0x18] sm:$0xf] %v473
  %v475 = vld [vmem:[%s447 + $0x1c] sm:$0x1]
  %v476 = vsel %vm456, %v318, %v475
  %477 = vst [vmem:[%s447 + $0x1c] sm:$0x1] %v476
  %v478 = vld [vmem:[%s447 + $0x20] sm:$0xf]
  %v479 = vsel %vm450, %v325, %v478
  %480 = vst [vmem:[%s447 + $0x20] sm:$0xf] %v479
  %v481 = vld [vmem:[%s447 + $0x24] sm:$0x1]
  %v482 = vsel %vm456, %v326, %v481
  %483 = vst [vmem:[%s447 + $0x24] sm:$0x1] %v482
  %v484 = vld [vmem:[%s447 + $0x28] sm:$0xf]
  %v485 = vsel %vm450, %v333, %v484
  %486 = vst [vmem:[%s447 + $0x28] sm:$0xf] %v485
  %v487 = vld [vmem:[%s447 + $0x2c] sm:$0x1]
  %v488 = vsel %vm456, %v334, %v487
  %489 = vst [vmem:[%s447 + $0x2c] sm:$0x1] %v488
  %v490 = vld [vmem:[%s447 + $0x30] sm:$0xf]
  %v491 = vsel %vm450, %v341, %v490
  %492 = vst [vmem:[%s447 + $0x30] sm:$0xf] %v491
  %v493 = vld [vmem:[%s447 + $0x34] sm:$0x1]
  %v494 = vsel %vm456, %v342, %v493
  %495 = vst [vmem:[%s447 + $0x34] sm:$0x1] %v494
  %v496 = vld [vmem:[%s447 + $0x38] sm:$0xf]
  %v497 = vsel %vm450, %v349, %v496
  %498 = vst [vmem:[%s447 + $0x38] sm:$0xf] %v497
  %v499 = vld [vmem:[%s447 + $0x3c] sm:$0x1]
  %v500 = vsel %vm456, %v350, %v499
  %501 = vst [vmem:[%s447 + $0x3c] sm:$0x1] %v500
  %v502 = vld [vmem:[%s447 + $0x50] sm:$0xf]
  %v503 = vsel %vm450, %v357, %v502
  %504 = vst [vmem:[%s447 + $0x50] sm:$0xf] %v503
  %v505 = vld [vmem:[%s447 + $0x54] sm:$0x1]
  %v506 = vsel %vm456, %v358, %v505
  %507 = vst [vmem:[%s447 + $0x54] sm:$0x1] %v506
  %v508 = vld [vmem:[%s447 + $0x58] sm:$0xf]
  %v509 = vsel %vm450, %v365, %v508
  %510 = vst [vmem:[%s447 + $0x58] sm:$0xf] %v509
  %v511 = vld [vmem:[%s447 + $0x5c] sm:$0x1]
  %v512 = vsel %vm456, %v366, %v511
  %513 = vst [vmem:[%s447 + $0x5c] sm:$0x1] %v512
  %v514 = vld [vmem:[%s447 + $0x60] sm:$0xf]
  %v515 = vsel %vm450, %v373, %v514
  %516 = vst [vmem:[%s447 + $0x60] sm:$0xf] %v515
  %v517 = vld [vmem:[%s447 + $0x64] sm:$0x1]
  %v518 = vsel %vm456, %v374, %v517
  %519 = vst [vmem:[%s447 + $0x64] sm:$0x1] %v518
  %v520 = vld [vmem:[%s447 + $0x68] sm:$0xf]
  %v521 = vsel %vm450, %v381, %v520
  %522 = vst [vmem:[%s447 + $0x68] sm:$0xf] %v521
  %v523 = vld [vmem:[%s447 + $0x6c] sm:$0x1]
  %v524 = vsel %vm456, %v382, %v523
  %525 = vst [vmem:[%s447 + $0x6c] sm:$0x1] %v524
  %v526 = vld [vmem:[%s447 + $0x70] sm:$0xf]
  %v527 = vsel %vm450, %v389, %v526
  %528 = vst [vmem:[%s447 + $0x70] sm:$0xf] %v527
  %v529 = vld [vmem:[%s447 + $0x74] sm:$0x1]
  %v530 = vsel %vm456, %v390, %v529
  %531 = vst [vmem:[%s447 + $0x74] sm:$0x1] %v530
  %v532 = vld [vmem:[%s447 + $0x78] sm:$0xf]
  %v533 = vsel %vm450, %v397, %v532
  %534 = vst [vmem:[%s447 + $0x78] sm:$0xf] %v533
  %v535 = vld [vmem:[%s447 + $0x7c] sm:$0x1]
  %v536 = vsel %vm456, %v398, %v535
  %537 = vst [vmem:[%s447 + $0x7c] sm:$0x1] %v536
  %v538 = vld [vmem:[%s447 + $0x80] sm:$0xf]
  %v539 = vsel %vm450, %v405, %v538
  %540 = vst [vmem:[%s447 + $0x80] sm:$0xf] %v539
  %v541 = vld [vmem:[%s447 + $0x84] sm:$0x1]
  %v542 = vsel %vm456, %v406, %v541
  %543 = vst [vmem:[%s447 + $0x84] sm:$0x1] %v542
  %v544 = vld [vmem:[%s447 + $0x88] sm:$0xf]
  %v545 = vsel %vm450, %v413, %v544
  %546 = vst [vmem:[%s447 + $0x88] sm:$0xf] %v545
  %v547 = vld [vmem:[%s447 + $0x8c] sm:$0x1]
  %v548 = vsel %vm456, %v414, %v547
  %549 = vst [vmem:[%s447 + $0x8c] sm:$0x1] %v548
  %v550 = vld [vmem:[#allocation2] sm:$0xf]
  %v551 = vld [vmem:[#allocation2 + $0x8] sm:$0xf]
  %v552 = vld [vmem:[#allocation2 + $0x10] sm:$0xf]
  %v553 = vld [vmem:[#allocation2 + $0x18] sm:$0xf]
  %v554 = vld [vmem:[#allocation2 + $0x20] sm:$0xf]
  %v555 = vld [vmem:[#allocation2 + $0x28] sm:$0xf]
  %v556 = vld [vmem:[#allocation2 + $0x30] sm:$0xf]
  %v557 = vld [vmem:[#allocation2 + $0x38] sm:$0xf]
  %v558 = vld [vmem:[#allocation2 + $0x50] sm:$0xf]
  %v559 = vld [vmem:[#allocation2 + $0x58] sm:$0xf]
  %v560 = vld [vmem:[#allocation2 + $0x60] sm:$0xf]
  %v561 = vld [vmem:[#allocation2 + $0x68] sm:$0xf]
  %v562 = vld [vmem:[#allocation2 + $0x70] sm:$0xf]
  %v563 = vld [vmem:[#allocation2 + $0x78] sm:$0xf]
  %v564 = vld [vmem:[#allocation2 + $0x80] sm:$0xf]
  %v565 = vld [vmem:[#allocation2 + $0x88] sm:$0xf]
  %v566 = vld [vmem:[#allocation2 + $0x4] sm:$0x1]
  %v567 = vld [vmem:[#allocation2 + $0xc] sm:$0x1]
  %v568 = vld [vmem:[#allocation2 + $0x14] sm:$0x1]
  %v569 = vld [vmem:[#allocation2 + $0x1c] sm:$0x1]
  %v570 = vld [vmem:[#allocation2 + $0x24] sm:$0x1]
  %v571 = vld [vmem:[#allocation2 + $0x2c] sm:$0x1]
  %v572 = vld [vmem:[#allocation2 + $0x34] sm:$0x1]
  %v573 = vld [vmem:[#allocation2 + $0x3c] sm:$0x1]
  %v574 = vld [vmem:[#allocation2 + $0x54] sm:$0x1]
  %v575 = vld [vmem:[#allocation2 + $0x5c] sm:$0x1]
  %v576 = vld [vmem:[#allocation2 + $0x64] sm:$0x1]
  %v577 = vld [vmem:[#allocation2 + $0x6c] sm:$0x1]
  %v578 = vld [vmem:[#allocation2 + $0x74] sm:$0x1]
  %v579 = vld [vmem:[#allocation2 + $0x7c] sm:$0x1]
  %v580 = vld [vmem:[#allocation2 + $0x84] sm:$0x1]
  %v581 = vld [vmem:[#allocation2 + $0x8c] sm:$0x1]
  %vm582 = vsmask.f32 3328
  %vm583 = vsmask.f32 7440
  %vm584 = vmor %vm582, %vm583
  %v586 = vshrl.u32 %v550, 16
  %v588 = vrot.slane %v586, 4
  %v589 = vshll.u32 %v550, 16
  %v591 = vrot.slane %v589, 5
  %v592 = vor.u32 %v588, %v591
  %v593 = vrot.slane %v592, 4
  %v595 = vshll.u32 %v566, 16
  %v597 = vrot.slane %v595, 5
  %v598 = vsel %vm584, %v593, %v597
  %v600 = vshrl.u32 %v551, 16
  %v602 = vrot.slane %v600, 4
  %v603 = vshll.u32 %v551, 16
  %v605 = vrot.slane %v603, 5
  %v606 = vor.u32 %v602, %v605
  %v607 = vrot.slane %v606, 4
  %v609 = vshll.u32 %v567, 16
  %v611 = vrot.slane %v609, 5
  %v612 = vsel %vm584, %v607, %v611
  %v614 = vshrl.u32 %v552, 16
  %v616 = vrot.slane %v614, 4
  %v617 = vshll.u32 %v552, 16
  %v619 = vrot.slane %v617, 5
  %v620 = vor.u32 %v616, %v619
  %v621 = vrot.slane %v620, 4
  %v623 = vshll.u32 %v568, 16
  %v625 = vrot.slane %v623, 5
  %v626 = vsel %vm584, %v621, %v625
  %v628 = vshrl.u32 %v553, 16
  %v630 = vrot.slane %v628, 4
  %v631 = vshll.u32 %v553, 16
  %v633 = vrot.slane %v631, 5
  %v634 = vor.u32 %v630, %v633
  %v635 = vrot.slane %v634, 4
  %v637 = vshll.u32 %v569, 16
  %v639 = vrot.slane %v637, 5
  %v640 = vsel %vm584, %v635, %v639
  %v642 = vshrl.u32 %v554, 16
  %v644 = vrot.slane %v642, 4
  %v645 = vshll.u32 %v554, 16
  %v647 = vrot.slane %v645, 5
  %v648 = vor.u32 %v644, %v647
  %v649 = vrot.slane %v648, 4
  %v651 = vshll.u32 %v570, 16
  %v653 = vrot.slane %v651, 5
  %v654 = vsel %vm584, %v649, %v653
  %v656 = vshrl.u32 %v555, 16
  %v658 = vrot.slane %v656, 4
  %v659 = vshll.u32 %v555, 16
  %v661 = vrot.slane %v659, 5
  %v662 = vor.u32 %v658, %v661
  %v663 = vrot.slane %v662, 4
  %v665 = vshll.u32 %v571, 16
  %v667 = vrot.slane %v665, 5
  %v668 = vsel %vm584, %v663, %v667
  %v670 = vshrl.u32 %v556, 16
  %v672 = vrot.slane %v670, 4
  %v673 = vshll.u32 %v556, 16
  %v675 = vrot.slane %v673, 5
  %v676 = vor.u32 %v672, %v675
  %v677 = vrot.slane %v676, 4
  %v679 = vshll.u32 %v572, 16
  %v681 = vrot.slane %v679, 5
  %v682 = vsel %vm584, %v677, %v681
  %v684 = vshrl.u32 %v557, 16
  %v686 = vrot.slane %v684, 4
  %v687 = vshll.u32 %v557, 16
  %v689 = vrot.slane %v687, 5
  %v690 = vor.u32 %v686, %v689
  %v691 = vrot.slane %v690, 4
  %v693 = vshll.u32 %v573, 16
  %v695 = vrot.slane %v693, 5
  %v696 = vsel %vm584, %v691, %v695
  %v698 = vshrl.u32 %v558, 16
  %v700 = vrot.slane %v698, 4
  %v701 = vshll.u32 %v558, 16
  %v703 = vrot.slane %v701, 5
  %v704 = vor.u32 %v700, %v703
  %v705 = vrot.slane %v704, 4
  %v707 = vshll.u32 %v574, 16
  %v709 = vrot.slane %v707, 5
  %v710 = vsel %vm584, %v705, %v709
  %v712 = vshrl.u32 %v559, 16
  %v714 = vrot.slane %v712, 4
  %v715 = vshll.u32 %v559, 16
  %v717 = vrot.slane %v715, 5
  %v718 = vor.u32 %v714, %v717
  %v719 = vrot.slane %v718, 4
  %v721 = vshll.u32 %v575, 16
  %v723 = vrot.slane %v721, 5
  %v724 = vsel %vm584, %v719, %v723
  %v726 = vshrl.u32 %v560, 16
  %v728 = vrot.slane %v726, 4
  %v729 = vshll.u32 %v560, 16
  %v731 = vrot.slane %v729, 5
  %v732 = vor.u32 %v728, %v731
  %v733 = vrot.slane %v732, 4
  %v735 = vshll.u32 %v576, 16
  %v737 = vrot.slane %v735, 5
  %v738 = vsel %vm584, %v733, %v737
  %v740 = vshrl.u32 %v561, 16
  %v742 = vrot.slane %v740, 4
  %v743 = vshll.u32 %v561, 16
  %v745 = vrot.slane %v743, 5
  %v746 = vor.u32 %v742, %v745
  %v747 = vrot.slane %v746, 4
  %v749 = vshll.u32 %v577, 16
  %v751 = vrot.slane %v749, 5
  %v752 = vsel %vm584, %v747, %v751
  %v754 = vshrl.u32 %v562, 16
  %v756 = vrot.slane %v754, 4
  %v757 = vshll.u32 %v562, 16
  %v759 = vrot.slane %v757, 5
  %v760 = vor.u32 %v756, %v759
  %v761 = vrot.slane %v760, 4
  %v763 = vshll.u32 %v578, 16
  %v765 = vrot.slane %v763, 5
  %v766 = vsel %vm584, %v761, %v765
  %v768 = vshrl.u32 %v563, 16
  %v770 = vrot.slane %v768, 4
  %v771 = vshll.u32 %v563, 16
  %v773 = vrot.slane %v771, 5
  %v774 = vor.u32 %v770, %v773
  %v775 = vrot.slane %v774, 4
  %v777 = vshll.u32 %v579, 16
  %v779 = vrot.slane %v777, 5
  %v780 = vsel %vm584, %v775, %v779
  %v782 = vshrl.u32 %v564, 16
  %v784 = vrot.slane %v782, 4
  %v785 = vshll.u32 %v564, 16
  %v787 = vrot.slane %v785, 5
  %v788 = vor.u32 %v784, %v787
  %v789 = vrot.slane %v788, 4
  %v791 = vshll.u32 %v580, 16
  %v793 = vrot.slane %v791, 5
  %v794 = vsel %vm584, %v789, %v793
  %v796 = vshrl.u32 %v565, 16
  %v798 = vrot.slane %v796, 4
  %v799 = vshll.u32 %v565, 16
  %v801 = vrot.slane %v799, 5
  %v802 = vor.u32 %v798, %v801
  %v803 = vrot.slane %v802, 4
  %v805 = vshll.u32 %v581, 16
  %v807 = vrot.slane %v805, 5
  %v808 = vsel %vm584, %v803, %v807
  %v809 = vld [vmem:[#allocation2] sm:$0xe]
  %v810 = vld [vmem:[#allocation2 + $0x8] sm:$0xe]
  %v811 = vld [vmem:[#allocation2 + $0x10] sm:$0xe]
  %v812 = vld [vmem:[#allocation2 + $0x18] sm:$0xe]
  %v813 = vld [vmem:[#allocation2 + $0x20] sm:$0xe]
  %v814 = vld [vmem:[#allocation2 + $0x28] sm:$0xe]
  %v815 = vld [vmem:[#allocation2 + $0x30] sm:$0xe]
  %v816 = vld [vmem:[#allocation2 + $0x38] sm:$0xe]
  %v817 = vld [vmem:[#allocation2 + $0x50] sm:$0xe]
  %v818 = vld [vmem:[#allocation2 + $0x58] sm:$0xe]
  %v819 = vld [vmem:[#allocation2 + $0x60] sm:$0xe]
  %v820 = vld [vmem:[#allocation2 + $0x68] sm:$0xe]
  %v821 = vld [vmem:[#allocation2 + $0x70] sm:$0xe]
  %v822 = vld [vmem:[#allocation2 + $0x78] sm:$0xe]
  %v823 = vld [vmem:[#allocation2 + $0x80] sm:$0xe]
  %v824 = vld [vmem:[#allocation2 + $0x88] sm:$0xe]
  %vm857 = vcmask 1042432
  %vm858 = vcmask 1046532
  %vm859 = vmor %vm857, %vm858
  %v860 = vrot.slane %v809, 5
  %v861 = vrot.slane %v860, 4
  %v862 = vrot.slane %v566, 5
  %v863 = vsel %vm859, %v861, %v862
  %v864 = vrot.slane %v810, 5
  %v865 = vrot.slane %v864, 4
  %v866 = vrot.slane %v567, 5
  %v867 = vsel %vm859, %v865, %v866
  %v868 = vrot.slane %v811, 5
  %v869 = vrot.slane %v868, 4
  %v870 = vrot.slane %v568, 5
  %v871 = vsel %vm859, %v869, %v870
  %v872 = vrot.slane %v812, 5
  %v873 = vrot.slane %v872, 4
  %v874 = vrot.slane %v569, 5
  %v875 = vsel %vm859, %v873, %v874
  %v876 = vrot.slane %v813, 5
  %v877 = vrot.slane %v876, 4
  %v878 = vrot.slane %v570, 5
  %v879 = vsel %vm859, %v877, %v878
  %v880 = vrot.slane %v814, 5
  %v881 = vrot.slane %v880, 4
  %v882 = vrot.slane %v571, 5
  %v883 = vsel %vm859, %v881, %v882
  %v884 = vrot.slane %v815, 5
  %v885 = vrot.slane %v884, 4
  %v886 = vrot.slane %v572, 5
  %v887 = vsel %vm859, %v885, %v886
  %v888 = vrot.slane %v816, 5
  %v889 = vrot.slane %v888, 4
  %v890 = vrot.slane %v573, 5
  %v891 = vsel %vm859, %v889, %v890
  %v892 = vrot.slane %v817, 5
  %v893 = vrot.slane %v892, 4
  %v894 = vrot.slane %v574, 5
  %v895 = vsel %vm859, %v893, %v894
  %v896 = vrot.slane %v818, 5
  %v897 = vrot.slane %v896, 4
  %v898 = vrot.slane %v575, 5
  %v899 = vsel %vm859, %v897, %v898
  %v900 = vrot.slane %v819, 5
  %v901 = vrot.slane %v900, 4
  %v902 = vrot.slane %v576, 5
  %v903 = vsel %vm859, %v901, %v902
  %v904 = vrot.slane %v820, 5
  %v905 = vrot.slane %v904, 4
  %v906 = vrot.slane %v577, 5
  %v907 = vsel %vm859, %v905, %v906
  %v908 = vrot.slane %v821, 5
  %v909 = vrot.slane %v908, 4
  %v910 = vrot.slane %v578, 5
  %v911 = vsel %vm859, %v909, %v910
  %v912 = vrot.slane %v822, 5
  %v913 = vrot.slane %v912, 4
  %v914 = vrot.slane %v579, 5
  %v915 = vsel %vm859, %v913, %v914
  %v916 = vrot.slane %v823, 5
  %v917 = vrot.slane %v916, 4
  %v918 = vrot.slane %v580, 5
  %v919 = vsel %vm859, %v917, %v918
  %v920 = vrot.slane %v824, 5
  %v921 = vrot.slane %v920, 4
  %v922 = vrot.slane %v581, 5
  %v923 = vsel %vm859, %v921, %v922
  %v924 = vld [vmem:[%s447] sm:$0xf]
  %v925 = vld [vmem:[%s447 + $0x8] sm:$0xf]
  %v926 = vld [vmem:[%s447 + $0x10] sm:$0xf]
  %v927 = vld [vmem:[%s447 + $0x18] sm:$0xf]
  %v928 = vld [vmem:[%s447 + $0x20] sm:$0xf]
  %v929 = vld [vmem:[%s447 + $0x28] sm:$0xf]
  %v930 = vld [vmem:[%s447 + $0x30] sm:$0xf]
  %v931 = vld [vmem:[%s447 + $0x38] sm:$0xf]
  %v932 = vld [vmem:[%s447 + $0x50] sm:$0xf]
  %v933 = vld [vmem:[%s447 + $0x58] sm:$0xf]
  %v934 = vld [vmem:[%s447 + $0x60] sm:$0xf]
  %v935 = vld [vmem:[%s447 + $0x68] sm:$0xf]
  %v936 = vld [vmem:[%s447 + $0x70] sm:$0xf]
  %v937 = vld [vmem:[%s447 + $0x78] sm:$0xf]
  %v938 = vld [vmem:[%s447 + $0x80] sm:$0xf]
  %v939 = vld [vmem:[%s447 + $0x88] sm:$0xf]
  %v940 = vld [vmem:[%s447 + $0x4] sm:$0x1]
  %v941 = vld [vmem:[%s447 + $0xc] sm:$0x1]
  %v942 = vld [vmem:[%s447 + $0x14] sm:$0x1]
  %v943 = vld [vmem:[%s447 + $0x1c] sm:$0x1]
  %v944 = vld [vmem:[%s447 + $0x24] sm:$0x1]
  %v945 = vld [vmem:[%s447 + $0x2c] sm:$0x1]
  %v946 = vld [vmem:[%s447 + $0x34] sm:$0x1]
  %v947 = vld [vmem:[%s447 + $0x3c] sm:$0x1]
  %v948 = vld [vmem:[%s447 + $0x54] sm:$0x1]
  %v949 = vld [vmem:[%s447 + $0x5c] sm:$0x1]
  %v950 = vld [vmem:[%s447 + $0x64] sm:$0x1]
  %v951 = vld [vmem:[%s447 + $0x6c] sm:$0x1]
  %v952 = vld [vmem:[%s447 + $0x74] sm:$0x1]
  %v953 = vld [vmem:[%s447 + $0x7c] sm:$0x1]
  %v954 = vld [vmem:[%s447 + $0x84] sm:$0x1]
  %v955 = vld [vmem:[%s447 + $0x8c] sm:$0x1]
  %v957 = vshrl.u32 %v924, 16
  %v959 = vrot.slane %v957, 4
  %v960 = vshll.u32 %v924, 16
  %v962 = vrot.slane %v960, 5
  %v963 = vor.u32 %v959, %v962
  %v964 = vrot.slane %v963, 4
  %v966 = vshll.u32 %v940, 16
  %v968 = vrot.slane %v966, 5
  %v969 = vsel %vm584, %v964, %v968
  %v971 = vshrl.u32 %v925, 16
  %v973 = vrot.slane %v971, 4
  %v974 = vshll.u32 %v925, 16
  %v976 = vrot.slane %v974, 5
  %v977 = vor.u32 %v973, %v976
  %v978 = vrot.slane %v977, 4
  %v980 = vshll.u32 %v941, 16
  %v982 = vrot.slane %v980, 5
  %v983 = vsel %vm584, %v978, %v982
  %v985 = vshrl.u32 %v926, 16
  %v987 = vrot.slane %v985, 4
  %v988 = vshll.u32 %v926, 16
  %v990 = vrot.slane %v988, 5
  %v991 = vor.u32 %v987, %v990
  %v992 = vrot.slane %v991, 4
  %v994 = vshll.u32 %v942, 16
  %v996 = vrot.slane %v994, 5
  %v997 = vsel %vm584, %v992, %v996
  %v999 = vshrl.u32 %v927, 16
  %v1001 = vrot.slane %v999, 4
  %v1002 = vshll.u32 %v927, 16
  %v1004 = vrot.slane %v1002, 5
  %v1005 = vor.u32 %v1001, %v1004
  %v1006 = vrot.slane %v1005, 4
  %v1008 = vshll.u32 %v943, 16
  %v1010 = vrot.slane %v1008, 5
  %v1011 = vsel %vm584, %v1006, %v1010
  %v1013 = vshrl.u32 %v928, 16
  %v1015 = vrot.slane %v1013, 4
  %v1016 = vshll.u32 %v928, 16
  %v1018 = vrot.slane %v1016, 5
  %v1019 = vor.u32 %v1015, %v1018
  %v1020 = vrot.slane %v1019, 4
  %v1022 = vshll.u32 %v944, 16
  %v1024 = vrot.slane %v1022, 5
  %v1025 = vsel %vm584, %v1020, %v1024
  %v1027 = vshrl.u32 %v929, 16
  %v1029 = vrot.slane %v1027, 4
  %v1030 = vshll.u32 %v929, 16
  %v1032 = vrot.slane %v1030, 5
  %v1033 = vor.u32 %v1029, %v1032
  %v1034 = vrot.slane %v1033, 4
  %v1036 = vshll.u32 %v945, 16
  %v1038 = vrot.slane %v1036, 5
  %v1039 = vsel %vm584, %v1034, %v1038
  %v1041 = vshrl.u32 %v930, 16
  %v1043 = vrot.slane %v1041, 4
  %v1044 = vshll.u32 %v930, 16
  %v1046 = vrot.slane %v1044, 5
  %v1047 = vor.u32 %v1043, %v1046
  %v1048 = vrot.slane %v1047, 4
  %v1050 = vshll.u32 %v946, 16
  %v1052 = vrot.slane %v1050, 5
  %v1053 = vsel %vm584, %v1048, %v1052
  %v1055 = vshrl.u32 %v931, 16
  %v1057 = vrot.slane %v1055, 4
  %v1058 = vshll.u32 %v931, 16
  %v1060 = vrot.slane %v1058, 5
  %v1061 = vor.u32 %v1057, %v1060
  %v1062 = vrot.slane %v1061, 4
  %v1064 = vshll.u32 %v947, 16
  %v1066 = vrot.slane %v1064, 5
  %v1067 = vsel %vm584, %v1062, %v1066
  %v1069 = vshrl.u32 %v932, 16
  %v1071 = vrot.slane %v1069, 4
  %v1072 = vshll.u32 %v932, 16
  %v1074 = vrot.slane %v1072, 5
  %v1075 = vor.u32 %v1071, %v1074
  %v1076 = vrot.slane %v1075, 4
  %v1078 = vshll.u32 %v948, 16
  %v1080 = vrot.slane %v1078, 5
  %v1081 = vsel %vm584, %v1076, %v1080
  %v1083 = vshrl.u32 %v933, 16
  %v1085 = vrot.slane %v1083, 4
  %v1086 = vshll.u32 %v933, 16
  %v1088 = vrot.slane %v1086, 5
  %v1089 = vor.u32 %v1085, %v1088
  %v1090 = vrot.slane %v1089, 4
  %v1092 = vshll.u32 %v949, 16
  %v1094 = vrot.slane %v1092, 5
  %v1095 = vsel %vm584, %v1090, %v1094
  %v1097 = vshrl.u32 %v934, 16
  %v1099 = vrot.slane %v1097, 4
  %v1100 = vshll.u32 %v934, 16
  %v1102 = vrot.slane %v1100, 5
  %v1103 = vor.u32 %v1099, %v1102
  %v1104 = vrot.slane %v1103, 4
  %v1106 = vshll.u32 %v950, 16
  %v1108 = vrot.slane %v1106, 5
  %v1109 = vsel %vm584, %v1104, %v1108
  %v1111 = vshrl.u32 %v935, 16
  %v1113 = vrot.slane %v1111, 4
  %v1114 = vshll.u32 %v935, 16
  %v1116 = vrot.slane %v1114, 5
  %v1117 = vor.u32 %v1113, %v1116
  %v1118 = vrot.slane %v1117, 4
  %v1120 = vshll.u32 %v951, 16
  %v1122 = vrot.slane %v1120, 5
  %v1123 = vsel %vm584, %v1118, %v1122
  %v1125 = vshrl.u32 %v936, 16
  %v1127 = vrot.slane %v1125, 4
  %v1128 = vshll.u32 %v936, 16
  %v1130 = vrot.slane %v1128, 5
  %v1131 = vor.u32 %v1127, %v1130
  %v1132 = vrot.slane %v1131, 4
  %v1134 = vshll.u32 %v952, 16
  %v1136 = vrot.slane %v1134, 5
  %v1137 = vsel %vm584, %v1132, %v1136
  %v1139 = vshrl.u32 %v937, 16
  %v1141 = vrot.slane %v1139, 4
  %v1142 = vshll.u32 %v937, 16
  %v1144 = vrot.slane %v1142, 5
  %v1145 = vor.u32 %v1141, %v1144
  %v1146 = vrot.slane %v1145, 4
  %v1148 = vshll.u32 %v953, 16
  %v1150 = vrot.slane %v1148, 5
  %v1151 = vsel %vm584, %v1146, %v1150
  %v1153 = vshrl.u32 %v938, 16
  %v1155 = vrot.slane %v1153, 4
  %v1156 = vshll.u32 %v938, 16
  %v1158 = vrot.slane %v1156, 5
  %v1159 = vor.u32 %v1155, %v1158
  %v1160 = vrot.slane %v1159, 4
  %v1162 = vshll.u32 %v954, 16
  %v1164 = vrot.slane %v1162, 5
  %v1165 = vsel %vm584, %v1160, %v1164
  %v1167 = vshrl.u32 %v939, 16
  %v1169 = vrot.slane %v1167, 4
  %v1170 = vshll.u32 %v939, 16
  %v1172 = vrot.slane %v1170, 5
  %v1173 = vor.u32 %v1169, %v1172
  %v1174 = vrot.slane %v1173, 4
  %v1176 = vshll.u32 %v955, 16
  %v1178 = vrot.slane %v1176, 5
  %v1179 = vsel %vm584, %v1174, %v1178
  %v1180 = vld [vmem:[%s447] sm:$0xe]
  %v1181 = vld [vmem:[%s447 + $0x8] sm:$0xe]
  %v1182 = vld [vmem:[%s447 + $0x10] sm:$0xe]
  %v1183 = vld [vmem:[%s447 + $0x18] sm:$0xe]
  %v1184 = vld [vmem:[%s447 + $0x20] sm:$0xe]
  %v1185 = vld [vmem:[%s447 + $0x28] sm:$0xe]
  %v1186 = vld [vmem:[%s447 + $0x30] sm:$0xe]
  %v1187 = vld [vmem:[%s447 + $0x38] sm:$0xe]
  %v1188 = vld [vmem:[%s447 + $0x50] sm:$0xe]
  %v1189 = vld [vmem:[%s447 + $0x58] sm:$0xe]
  %v1190 = vld [vmem:[%s447 + $0x60] sm:$0xe]
  %v1191 = vld [vmem:[%s447 + $0x68] sm:$0xe]
  %v1192 = vld [vmem:[%s447 + $0x70] sm:$0xe]
  %v1193 = vld [vmem:[%s447 + $0x78] sm:$0xe]
  %v1194 = vld [vmem:[%s447 + $0x80] sm:$0xe]
  %v1195 = vld [vmem:[%s447 + $0x88] sm:$0xe]
  %v1228 = vrot.slane %v1180, 5
  %v1229 = vrot.slane %v1228, 4
  %v1230 = vrot.slane %v940, 5
  %v1231 = vsel %vm859, %v1229, %v1230
  %v1232 = vrot.slane %v1181, 5
  %v1233 = vrot.slane %v1232, 4
  %v1234 = vrot.slane %v941, 5
  %v1235 = vsel %vm859, %v1233, %v1234
  %v1236 = vrot.slane %v1182, 5
  %v1237 = vrot.slane %v1236, 4
  %v1238 = vrot.slane %v942, 5
  %v1239 = vsel %vm859, %v1237, %v1238
  %v1240 = vrot.slane %v1183, 5
  %v1241 = vrot.slane %v1240, 4
  %v1242 = vrot.slane %v943, 5
  %v1243 = vsel %vm859, %v1241, %v1242
  %v1244 = vrot.slane %v1184, 5
  %v1245 = vrot.slane %v1244, 4
  %v1246 = vrot.slane %v944, 5
  %v1247 = vsel %vm859, %v1245, %v1246
  %v1248 = vrot.slane %v1185, 5
  %v1249 = vrot.slane %v1248, 4
  %v1250 = vrot.slane %v945, 5
  %v1251 = vsel %vm859, %v1249, %v1250
  %v1252 = vrot.slane %v1186, 5
  %v1253 = vrot.slane %v1252, 4
  %v1254 = vrot.slane %v946, 5
  %v1255 = vsel %vm859, %v1253, %v1254
  %v1256 = vrot.slane %v1187, 5
  %v1257 = vrot.slane %v1256, 4
  %v1258 = vrot.slane %v947, 5
  %v1259 = vsel %vm859, %v1257, %v1258
  %v1260 = vrot.slane %v1188, 5
  %v1261 = vrot.slane %v1260, 4
  %v1262 = vrot.slane %v948, 5
  %v1263 = vsel %vm859, %v1261, %v1262
  %v1264 = vrot.slane %v1189, 5
  %v1265 = vrot.slane %v1264, 4
  %v1266 = vrot.slane %v949, 5
  %v1267 = vsel %vm859, %v1265, %v1266
  %v1268 = vrot.slane %v1190, 5
  %v1269 = vrot.slane %v1268, 4
  %v1270 = vrot.slane %v950, 5
  %v1271 = vsel %vm859, %v1269, %v1270
  %v1272 = vrot.slane %v1191, 5
  %v1273 = vrot.slane %v1272, 4
  %v1274 = vrot.slane %v951, 5
  %v1275 = vsel %vm859, %v1273, %v1274
  %v1276 = vrot.slane %v1192, 5
  %v1277 = vrot.slane %v1276, 4
  %v1278 = vrot.slane %v952, 5
  %v1279 = vsel %vm859, %v1277, %v1278
  %v1280 = vrot.slane %v1193, 5
  %v1281 = vrot.slane %v1280, 4
  %v1282 = vrot.slane %v953, 5
  %v1283 = vsel %vm859, %v1281, %v1282
  %v1284 = vrot.slane %v1194, 5
  %v1285 = vrot.slane %v1284, 4
  %v1286 = vrot.slane %v954, 5
  %v1287 = vsel %vm859, %v1285, %v1286
  %v1288 = vrot.slane %v1195, 5
  %v1289 = vrot.slane %v1288, 4
  %v1290 = vrot.slane %v955, 5
  %v1291 = vsel %vm859, %v1289, %v1290
  %s1292 = scalar_lea.vmem [#allocation2], 16
  %v1293 = vld [vmem:[%s1292] sm:$0xf]
  %v1294 = vld [vmem:[%s1292 + $0x8] sm:$0xf]
  %v1295 = vld [vmem:[%s1292 + $0x10] sm:$0xf]
  %v1296 = vld [vmem:[%s1292 + $0x18] sm:$0xf]
  %v1297 = vld [vmem:[%s1292 + $0x20] sm:$0xf]
  %v1298 = vld [vmem:[%s1292 + $0x28] sm:$0xf]
  %v1299 = vld [vmem:[%s1292 + $0x30] sm:$0xf]
  %v1300 = vld [vmem:[%s1292 + $0x38] sm:$0xf]
  %v1301 = vld [vmem:[%s1292 + $0x50] sm:$0xf]
  %v1302 = vld [vmem:[%s1292 + $0x58] sm:$0xf]
  %v1303 = vld [vmem:[%s1292 + $0x60] sm:$0xf]
  %v1304 = vld [vmem:[%s1292 + $0x68] sm:$0xf]
  %v1305 = vld [vmem:[%s1292 + $0x70] sm:$0xf]
  %v1306 = vld [vmem:[%s1292 + $0x78] sm:$0xf]
  %v1307 = vld [vmem:[%s1292 + $0x80] sm:$0xf]
  %v1308 = vld [vmem:[%s1292 + $0x88] sm:$0xf]
  %v1309 = vld [vmem:[%s1292 + $0x4] sm:$0x1]
  %v1310 = vld [vmem:[%s1292 + $0xc] sm:$0x1]
  %v1311 = vld [vmem:[%s1292 + $0x14] sm:$0x1]
  %v1312 = vld [vmem:[%s1292 + $0x1c] sm:$0x1]
  %v1313 = vld [vmem:[%s1292 + $0x24] sm:$0x1]
  %v1314 = vld [vmem:[%s1292 + $0x2c] sm:$0x1]
  %v1315 = vld [vmem:[%s1292 + $0x34] sm:$0x1]
  %v1316 = vld [vmem:[%s1292 + $0x3c] sm:$0x1]
  %v1317 = vld [vmem:[%s1292 + $0x54] sm:$0x1]
  %v1318 = vld [vmem:[%s1292 + $0x5c] sm:$0x1]
  %v1319 = vld [vmem:[%s1292 + $0x64] sm:$0x1]
  %v1320 = vld [vmem:[%s1292 + $0x6c] sm:$0x1]
  %v1321 = vld [vmem:[%s1292 + $0x74] sm:$0x1]
  %v1322 = vld [vmem:[%s1292 + $0x7c] sm:$0x1]
  %v1323 = vld [vmem:[%s1292 + $0x84] sm:$0x1]
  %v1324 = vld [vmem:[%s1292 + $0x8c] sm:$0x1]
  %v1326 = vshrl.u32 %v1293, 16
  %v1328 = vrot.slane %v1326, 4
  %v1329 = vshll.u32 %v1293, 16
  %v1331 = vrot.slane %v1329, 5
  %v1332 = vor.u32 %v1328, %v1331
  %v1333 = vrot.slane %v1332, 4
  %v1335 = vshll.u32 %v1309, 16
  %v1337 = vrot.slane %v1335, 5
  %v1338 = vsel %vm584, %v1333, %v1337
  %v1340 = vshrl.u32 %v1294, 16
  %v1342 = vrot.slane %v1340, 4
  %v1343 = vshll.u32 %v1294, 16
  %v1345 = vrot.slane %v1343, 5
  %v1346 = vor.u32 %v1342, %v1345
  %v1347 = vrot.slane %v1346, 4
  %v1349 = vshll.u32 %v1310, 16
  %v1351 = vrot.slane %v1349, 5
  %v1352 = vsel %vm584, %v1347, %v1351
  %v1354 = vshrl.u32 %v1295, 16
  %v1356 = vrot.slane %v1354, 4
  %v1357 = vshll.u32 %v1295, 16
  %v1359 = vrot.slane %v1357, 5
  %v1360 = vor.u32 %v1356, %v1359
  %v1361 = vrot.slane %v1360, 4
  %v1363 = vshll.u32 %v1311, 16
  %v1365 = vrot.slane %v1363, 5
  %v1366 = vsel %vm584, %v1361, %v1365
  %v1368 = vshrl.u32 %v1296, 16
  %v1370 = vrot.slane %v1368, 4
  %v1371 = vshll.u32 %v1296, 16
  %v1373 = vrot.slane %v1371, 5
  %v1374 = vor.u32 %v1370, %v1373
  %v1375 = vrot.slane %v1374, 4
  %v1377 = vshll.u32 %v1312, 16
  %v1379 = vrot.slane %v1377, 5
  %v1380 = vsel %vm584, %v1375, %v1379
  %v1382 = vshrl.u32 %v1297, 16
  %v1384 = vrot.slane %v1382, 4
  %v1385 = vshll.u32 %v1297, 16
  %v1387 = vrot.slane %v1385, 5
  %v1388 = vor.u32 %v1384, %v1387
  %v1389 = vrot.slane %v1388, 4
  %v1391 = vshll.u32 %v1313, 16
  %v1393 = vrot.slane %v1391, 5
  %v1394 = vsel %vm584, %v1389, %v1393
  %v1396 = vshrl.u32 %v1298, 16
  %v1398 = vrot.slane %v1396, 4
  %v1399 = vshll.u32 %v1298, 16
  %v1401 = vrot.slane %v1399, 5
  %v1402 = vor.u32 %v1398, %v1401
  %v1403 = vrot.slane %v1402, 4
  %v1405 = vshll.u32 %v1314, 16
  %v1407 = vrot.slane %v1405, 5
  %v1408 = vsel %vm584, %v1403, %v1407
  %v1410 = vshrl.u32 %v1299, 16
  %v1412 = vrot.slane %v1410, 4
  %v1413 = vshll.u32 %v1299, 16
  %v1415 = vrot.slane %v1413, 5
  %v1416 = vor.u32 %v1412, %v1415
  %v1417 = vrot.slane %v1416, 4
  %v1419 = vshll.u32 %v1315, 16
  %v1421 = vrot.slane %v1419, 5
  %v1422 = vsel %vm584, %v1417, %v1421
  %v1424 = vshrl.u32 %v1300, 16
  %v1426 = vrot.slane %v1424, 4
  %v1427 = vshll.u32 %v1300, 16
  %v1429 = vrot.slane %v1427, 5
  %v1430 = vor.u32 %v1426, %v1429
  %v1431 = vrot.slane %v1430, 4
  %v1433 = vshll.u32 %v1316, 16
  %v1435 = vrot.slane %v1433, 5
  %v1436 = vsel %vm584, %v1431, %v1435
  %v1438 = vshrl.u32 %v1301, 16
  %v1440 = vrot.slane %v1438, 4
  %v1441 = vshll.u32 %v1301, 16
  %v1443 = vrot.slane %v1441, 5
  %v1444 = vor.u32 %v1440, %v1443
  %v1445 = vrot.slane %v1444, 4
  %v1447 = vshll.u32 %v1317, 16
  %v1449 = vrot.slane %v1447, 5
  %v1450 = vsel %vm584, %v1445, %v1449
  %v1452 = vshrl.u32 %v1302, 16
  %v1454 = vrot.slane %v1452, 4
  %v1455 = vshll.u32 %v1302, 16
  %v1457 = vrot.slane %v1455, 5
  %v1458 = vor.u32 %v1454, %v1457
  %v1459 = vrot.slane %v1458, 4
  %v1461 = vshll.u32 %v1318, 16
  %v1463 = vrot.slane %v1461, 5
  %v1464 = vsel %vm584, %v1459, %v1463
  %v1466 = vshrl.u32 %v1303, 16
  %v1468 = vrot.slane %v1466, 4
  %v1469 = vshll.u32 %v1303, 16
  %v1471 = vrot.slane %v1469, 5
  %v1472 = vor.u32 %v1468, %v1471
  %v1473 = vrot.slane %v1472, 4
  %v1475 = vshll.u32 %v1319, 16
  %v1477 = vrot.slane %v1475, 5
  %v1478 = vsel %vm584, %v1473, %v1477
  %v1480 = vshrl.u32 %v1304, 16
  %v1482 = vrot.slane %v1480, 4
  %v1483 = vshll.u32 %v1304, 16
  %v1485 = vrot.slane %v1483, 5
  %v1486 = vor.u32 %v1482, %v1485
  %v1487 = vrot.slane %v1486, 4
  %v1489 = vshll.u32 %v1320, 16
  %v1491 = vrot.slane %v1489, 5
  %v1492 = vsel %vm584, %v1487, %v1491
  %v1494 = vshrl.u32 %v1305, 16
  %v1496 = vrot.slane %v1494, 4
  %v1497 = vshll.u32 %v1305, 16
  %v1499 = vrot.slane %v1497, 5
  %v1500 = vor.u32 %v1496, %v1499
  %v1501 = vrot.slane %v1500, 4
  %v1503 = vshll.u32 %v1321, 16
  %v1505 = vrot.slane %v1503, 5
  %v1506 = vsel %vm584, %v1501, %v1505
  %v1508 = vshrl.u32 %v1306, 16
  %v1510 = vrot.slane %v1508, 4
  %v1511 = vshll.u32 %v1306, 16
  %v1513 = vrot.slane %v1511, 5
  %v1514 = vor.u32 %v1510, %v1513
  %v1515 = vrot.slane %v1514, 4
  %v1517 = vshll.u32 %v1322, 16
  %v1519 = vrot.slane %v1517, 5
  %v1520 = vsel %vm584, %v1515, %v1519
  %v1522 = vshrl.u32 %v1307, 16
  %v1524 = vrot.slane %v1522, 4
  %v1525 = vshll.u32 %v1307, 16
  %v1527 = vrot.slane %v1525, 5
  %v1528 = vor.u32 %v1524, %v1527
  %v1529 = vrot.slane %v1528, 4
  %v1531 = vshll.u32 %v1323, 16
  %v1533 = vrot.slane %v1531, 5
  %v1534 = vsel %vm584, %v1529, %v1533
  %v1536 = vshrl.u32 %v1308, 16
  %v1538 = vrot.slane %v1536, 4
  %v1539 = vshll.u32 %v1308, 16
  %v1541 = vrot.slane %v1539, 5
  %v1542 = vor.u32 %v1538, %v1541
  %v1543 = vrot.slane %v1542, 4
  %v1545 = vshll.u32 %v1324, 16
  %v1547 = vrot.slane %v1545, 5
  %v1548 = vsel %vm584, %v1543, %v1547
  %v1549 = vld [vmem:[%s1292] sm:$0xe]
  %v1550 = vld [vmem:[%s1292 + $0x8] sm:$0xe]
  %v1551 = vld [vmem:[%s1292 + $0x10] sm:$0xe]
  %v1552 = vld [vmem:[%s1292 + $0x18] sm:$0xe]
  %v1553 = vld [vmem:[%s1292 + $0x20] sm:$0xe]
  %v1554 = vld [vmem:[%s1292 + $0x28] sm:$0xe]
  %v1555 = vld [vmem:[%s1292 + $0x30] sm:$0xe]
  %v1556 = vld [vmem:[%s1292 + $0x38] sm:$0xe]
  %v1557 = vld [vmem:[%s1292 + $0x50] sm:$0xe]
  %v1558 = vld [vmem:[%s1292 + $0x58] sm:$0xe]
  %v1559 = vld [vmem:[%s1292 + $0x60] sm:$0xe]
  %v1560 = vld [vmem:[%s1292 + $0x68] sm:$0xe]
  %v1561 = vld [vmem:[%s1292 + $0x70] sm:$0xe]
  %v1562 = vld [vmem:[%s1292 + $0x78] sm:$0xe]
  %v1563 = vld [vmem:[%s1292 + $0x80] sm:$0xe]
  %v1564 = vld [vmem:[%s1292 + $0x88] sm:$0xe]
  %v1597 = vrot.slane %v1549, 5
  %v1598 = vrot.slane %v1597, 4
  %v1599 = vrot.slane %v1309, 5
  %v1600 = vsel %vm859, %v1598, %v1599
  %v1601 = vrot.slane %v1550, 5
  %v1602 = vrot.slane %v1601, 4
  %v1603 = vrot.slane %v1310, 5
  %v1604 = vsel %vm859, %v1602, %v1603
  %v1605 = vrot.slane %v1551, 5
  %v1606 = vrot.slane %v1605, 4
  %v1607 = vrot.slane %v1311, 5
  %v1608 = vsel %vm859, %v1606, %v1607
  %v1609 = vrot.slane %v1552, 5
  %v1610 = vrot.slane %v1609, 4
  %v1611 = vrot.slane %v1312, 5
  %v1612 = vsel %vm859, %v1610, %v1611
  %v1613 = vrot.slane %v1553, 5
  %v1614 = vrot.slane %v1613, 4
  %v1615 = vrot.slane %v1313, 5
  %v1616 = vsel %vm859, %v1614, %v1615
  %v1617 = vrot.slane %v1554, 5
  %v1618 = vrot.slane %v1617, 4
  %v1619 = vrot.slane %v1314, 5
  %v1620 = vsel %vm859, %v1618, %v1619
  %v1621 = vrot.slane %v1555, 5
  %v1622 = vrot.slane %v1621, 4
  %v1623 = vrot.slane %v1315, 5
  %v1624 = vsel %vm859, %v1622, %v1623
  %v1625 = vrot.slane %v1556, 5
  %v1626 = vrot.slane %v1625, 4
  %v1627 = vrot.slane %v1316, 5
  %v1628 = vsel %vm859, %v1626, %v1627
  %v1629 = vrot.slane %v1557, 5
  %v1630 = vrot.slane %v1629, 4
  %v1631 = vrot.slane %v1317, 5
  %v1632 = vsel %vm859, %v1630, %v1631
  %v1633 = vrot.slane %v1558, 5
  %v1634 = vrot.slane %v1633, 4
  %v1635 = vrot.slane %v1318, 5
  %v1636 = vsel %vm859, %v1634, %v1635
  %v1637 = vrot.slane %v1559, 5
  %v1638 = vrot.slane %v1637, 4
  %v1639 = vrot.slane %v1319, 5
  %v1640 = vsel %vm859, %v1638, %v1639
  %v1641 = vrot.slane %v1560, 5
  %v1642 = vrot.slane %v1641, 4
  %v1643 = vrot.slane %v1320, 5
  %v1644 = vsel %vm859, %v1642, %v1643
  %v1645 = vrot.slane %v1561, 5
  %v1646 = vrot.slane %v1645, 4
  %v1647 = vrot.slane %v1321, 5
  %v1648 = vsel %vm859, %v1646, %v1647
  %v1649 = vrot.slane %v1562, 5
  %v1650 = vrot.slane %v1649, 4
  %v1651 = vrot.slane %v1322, 5
  %v1652 = vsel %vm859, %v1650, %v1651
  %v1653 = vrot.slane %v1563, 5
  %v1654 = vrot.slane %v1653, 4
  %v1655 = vrot.slane %v1323, 5
  %v1656 = vsel %vm859, %v1654, %v1655
  %v1657 = vrot.slane %v1564, 5
  %v1658 = vrot.slane %v1657, 4
  %v1659 = vrot.slane %v1324, 5
  %v1660 = vsel %vm859, %v1658, %v1659
  %v1677 = vunpack.c.l.b16 %v550
  %v1678 = vunpack.c.l.b16 %v551
  %v1679 = vunpack.c.l.b16 %v552
  %v1680 = vunpack.c.l.b16 %v553
  %v1681 = vunpack.c.l.b16 %v554
  %v1682 = vunpack.c.l.b16 %v555
  %v1683 = vunpack.c.l.b16 %v556
  %v1684 = vunpack.c.l.b16 %v557
  %v1685 = vunpack.c.l.b16 %v558
  %v1686 = vunpack.c.l.b16 %v559
  %v1687 = vunpack.c.l.b16 %v560
  %v1688 = vunpack.c.l.b16 %v561
  %v1689 = vunpack.c.l.b16 %v562
  %v1690 = vunpack.c.l.b16 %v563
  %v1691 = vunpack.c.l.b16 %v564
  %v1692 = vunpack.c.l.b16 %v565
  %v1693 = vpack.c.b16 %v1678, %v1677
  %v1694 = vpack.c.b16 %v1680, %v1679
  %v1695 = vpack.c.b16 %v1682, %v1681
  %v1696 = vpack.c.b16 %v1684, %v1683
  %v1697 = vpack.c.b16 %v1686, %v1685
  %v1698 = vpack.c.b16 %v1688, %v1687
  %v1699 = vpack.c.b16 %v1690, %v1689
  %v1700 = vpack.c.b16 %v1692, %v1691
  %v1701 = vunpack.c.l.b16 %v598
  %v1702 = vunpack.c.l.b16 %v612
  %v1703 = vunpack.c.l.b16 %v626
  %v1704 = vunpack.c.l.b16 %v640
  %v1705 = vunpack.c.l.b16 %v654
  %v1706 = vunpack.c.l.b16 %v668
  %v1707 = vunpack.c.l.b16 %v682
  %v1708 = vunpack.c.l.b16 %v696
  %v1709 = vunpack.c.l.b16 %v710
  %v1710 = vunpack.c.l.b16 %v724
  %v1711 = vunpack.c.l.b16 %v738
  %v1712 = vunpack.c.l.b16 %v752
  %v1713 = vunpack.c.l.b16 %v766
  %v1714 = vunpack.c.l.b16 %v780
  %v1715 = vunpack.c.l.b16 %v794
  %v1716 = vunpack.c.l.b16 %v808
  %v1717 = vpack.c.b16 %v1702, %v1701
  %v1718 = vpack.c.b16 %v1704, %v1703
  %v1719 = vpack.c.b16 %v1706, %v1705
  %v1720 = vpack.c.b16 %v1708, %v1707
  %v1721 = vpack.c.b16 %v1710, %v1709
  %v1722 = vpack.c.b16 %v1712, %v1711
  %v1723 = vpack.c.b16 %v1714, %v1713
  %v1724 = vpack.c.b16 %v1716, %v1715
  %1725 = vrot.lane.b32.xlu0 %v1717, 64
  %v1726 = vpop.permute.xlu0 %1725
  %1727 = vrot.lane.b32.xlu0 %v1718, 64
  %v1728 = vpop.permute.xlu0 %1727
  %1729 = vrot.lane.b32.xlu0 %v1719, 64
  %v1730 = vpop.permute.xlu0 %1729
  %1731 = vrot.lane.b32.xlu0 %v1720, 64
  %v1732 = vpop.permute.xlu0 %1731
  %1733 = vrot.lane.b32.xlu0 %v1721, 64
  %v1734 = vpop.permute.xlu0 %1733
  %1735 = vrot.lane.b32.xlu0 %v1722, 64
  %v1736 = vpop.permute.xlu0 %1735
  %1737 = vrot.lane.b32.xlu0 %v1723, 64
  %v1738 = vpop.permute.xlu0 %1737
  %1739 = vrot.lane.b32.xlu0 %v1724, 64
  %v1740 = vpop.permute.xlu0 %1739
  %v1741 = vunpack.c.l.b16 %v863
  %v1742 = vunpack.c.l.b16 %v867
  %v1743 = vunpack.c.l.b16 %v871
  %v1744 = vunpack.c.l.b16 %v875
  %v1745 = vunpack.c.l.b16 %v879
  %v1746 = vunpack.c.l.b16 %v883
  %v1747 = vunpack.c.l.b16 %v887
  %v1748 = vunpack.c.l.b16 %v891
  %v1749 = vunpack.c.l.b16 %v895
  %v1750 = vunpack.c.l.b16 %v899
  %v1751 = vunpack.c.l.b16 %v903
  %v1752 = vunpack.c.l.b16 %v907
  %v1753 = vunpack.c.l.b16 %v911
  %v1754 = vunpack.c.l.b16 %v915
  %v1755 = vunpack.c.l.b16 %v919
  %v1756 = vunpack.c.l.b16 %v923
  %v1757 = vpack.c.b16 %v1742, %v1741
  %v1758 = vpack.c.b16 %v1744, %v1743
  %v1759 = vpack.c.b16 %v1746, %v1745
  %v1760 = vpack.c.b16 %v1748, %v1747
  %v1761 = vpack.c.b16 %v1750, %v1749
  %v1762 = vpack.c.b16 %v1752, %v1751
  %v1763 = vpack.c.b16 %v1754, %v1753
  %v1764 = vpack.c.b16 %v1756, %v1755
  %v1781 = vunpack.c.l.b16 %v924
  %v1782 = vunpack.c.l.b16 %v925
  %v1783 = vunpack.c.l.b16 %v926
  %v1784 = vunpack.c.l.b16 %v927
  %v1785 = vunpack.c.l.b16 %v928
  %v1786 = vunpack.c.l.b16 %v929
  %v1787 = vunpack.c.l.b16 %v930
  %v1788 = vunpack.c.l.b16 %v931
  %v1789 = vunpack.c.l.b16 %v932
  %v1790 = vunpack.c.l.b16 %v933
  %v1791 = vunpack.c.l.b16 %v934
  %v1792 = vunpack.c.l.b16 %v935
  %v1793 = vunpack.c.l.b16 %v936
  %v1794 = vunpack.c.l.b16 %v937
  %v1795 = vunpack.c.l.b16 %v938
  %v1796 = vunpack.c.l.b16 %v939
  %v1797 = vpack.c.b16 %v1782, %v1781
  %v1798 = vpack.c.b16 %v1784, %v1783
  %v1799 = vpack.c.b16 %v1786, %v1785
  %v1800 = vpack.c.b16 %v1788, %v1787
  %v1801 = vpack.c.b16 %v1790, %v1789
  %v1802 = vpack.c.b16 %v1792, %v1791
  %v1803 = vpack.c.b16 %v1794, %v1793
  %v1804 = vpack.c.b16 %v1796, %v1795
  %1805 = vrot.lane.b32.xlu0 %v1797, 64
  %v1806 = vpop.permute.xlu0 %1805
  %1807 = vrot.lane.b32.xlu0 %v1798, 64
  %v1808 = vpop.permute.xlu0 %1807
  %1809 = vrot.lane.b32.xlu0 %v1799, 64
  %v1810 = vpop.permute.xlu0 %1809
  %1811 = vrot.lane.b32.xlu0 %v1800, 64
  %v1812 = vpop.permute.xlu0 %1811
  %1813 = vrot.lane.b32.xlu0 %v1801, 64
  %v1814 = vpop.permute.xlu0 %1813
  %1815 = vrot.lane.b32.xlu0 %v1802, 64
  %v1816 = vpop.permute.xlu0 %1815
  %1817 = vrot.lane.b32.xlu0 %v1803, 64
  %v1818 = vpop.permute.xlu0 %1817
  %1819 = vrot.lane.b32.xlu0 %v1804, 64
  %v1820 = vpop.permute.xlu0 %1819
  %v1821 = vunpack.c.l.b16 %v969
  %v1822 = vunpack.c.l.b16 %v983
  %v1823 = vunpack.c.l.b16 %v997
  %v1824 = vunpack.c.l.b16 %v1011
  %v1825 = vunpack.c.l.b16 %v1025
  %v1826 = vunpack.c.l.b16 %v1039
  %v1827 = vunpack.c.l.b16 %v1053
  %v1828 = vunpack.c.l.b16 %v1067
  %v1829 = vunpack.c.l.b16 %v1081
  %v1830 = vunpack.c.l.b16 %v1095
  %v1831 = vunpack.c.l.b16 %v1109
  %v1832 = vunpack.c.l.b16 %v1123
  %v1833 = vunpack.c.l.b16 %v1137
  %v1834 = vunpack.c.l.b16 %v1151
  %v1835 = vunpack.c.l.b16 %v1165
  %v1836 = vunpack.c.l.b16 %v1179
  %v1837 = vpack.c.b16 %v1822, %v1821
  %v1838 = vpack.c.b16 %v1824, %v1823
  %v1839 = vpack.c.b16 %v1826, %v1825
  %v1840 = vpack.c.b16 %v1828, %v1827
  %v1841 = vpack.c.b16 %v1830, %v1829
  %v1842 = vpack.c.b16 %v1832, %v1831
  %v1843 = vpack.c.b16 %v1834, %v1833
  %v1844 = vpack.c.b16 %v1836, %v1835
  %v1845 = vunpack.c.l.b16 %v1231
  %v1846 = vunpack.c.l.b16 %v1235
  %v1847 = vunpack.c.l.b16 %v1239
  %v1848 = vunpack.c.l.b16 %v1243
  %v1849 = vunpack.c.l.b16 %v1247
  %v1850 = vunpack.c.l.b16 %v1251
  %v1851 = vunpack.c.l.b16 %v1255
  %v1852 = vunpack.c.l.b16 %v1259
  %v1853 = vunpack.c.l.b16 %v1263
  %v1854 = vunpack.c.l.b16 %v1267
  %v1855 = vunpack.c.l.b16 %v1271
  %v1856 = vunpack.c.l.b16 %v1275
  %v1857 = vunpack.c.l.b16 %v1279
  %v1858 = vunpack.c.l.b16 %v1283
  %v1859 = vunpack.c.l.b16 %v1287
  %v1860 = vunpack.c.l.b16 %v1291
  %v1861 = vpack.c.b16 %v1846, %v1845
  %v1862 = vpack.c.b16 %v1848, %v1847
  %v1863 = vpack.c.b16 %v1850, %v1849
  %v1864 = vpack.c.b16 %v1852, %v1851
  %v1865 = vpack.c.b16 %v1854, %v1853
  %v1866 = vpack.c.b16 %v1856, %v1855
  %v1867 = vpack.c.b16 %v1858, %v1857
  %v1868 = vpack.c.b16 %v1860, %v1859
  %1869 = vrot.lane.b32.xlu0 %v1861, 64
  %v1870 = vpop.permute.xlu0 %1869
  %1871 = vrot.lane.b32.xlu0 %v1862, 64
  %v1872 = vpop.permute.xlu0 %1871
  %1873 = vrot.lane.b32.xlu0 %v1863, 64
  %v1874 = vpop.permute.xlu0 %1873
  %1875 = vrot.lane.b32.xlu0 %v1864, 64
  %v1876 = vpop.permute.xlu0 %1875
  %1877 = vrot.lane.b32.xlu0 %v1865, 64
  %v1878 = vpop.permute.xlu0 %1877
  %1879 = vrot.lane.b32.xlu0 %v1866, 64
  %v1880 = vpop.permute.xlu0 %1879
  %1881 = vrot.lane.b32.xlu0 %v1867, 64
  %v1882 = vpop.permute.xlu0 %1881
  %1883 = vrot.lane.b32.xlu0 %v1868, 64
  %v1884 = vpop.permute.xlu0 %1883
  %v1901 = vunpack.c.l.b16 %v1293
  %v1902 = vunpack.c.l.b16 %v1294
  %v1903 = vunpack.c.l.b16 %v1295
  %v1904 = vunpack.c.l.b16 %v1296
  %v1905 = vunpack.c.l.b16 %v1297
  %v1906 = vunpack.c.l.b16 %v1298
  %v1907 = vunpack.c.l.b16 %v1299
  %v1908 = vunpack.c.l.b16 %v1300
  %v1909 = vunpack.c.l.b16 %v1301
  %v1910 = vunpack.c.l.b16 %v1302
  %v1911 = vunpack.c.l.b16 %v1303
  %v1912 = vunpack.c.l.b16 %v1304
  %v1913 = vunpack.c.l.b16 %v1305
  %v1914 = vunpack.c.l.b16 %v1306
  %v1915 = vunpack.c.l.b16 %v1307
  %v1916 = vunpack.c.l.b16 %v1308
  %v1917 = vpack.c.b16 %v1902, %v1901
  %v1918 = vpack.c.b16 %v1904, %v1903
  %v1919 = vpack.c.b16 %v1906, %v1905
  %v1920 = vpack.c.b16 %v1908, %v1907
  %v1921 = vpack.c.b16 %v1910, %v1909
  %v1922 = vpack.c.b16 %v1912, %v1911
  %v1923 = vpack.c.b16 %v1914, %v1913
  %v1924 = vpack.c.b16 %v1916, %v1915
  %v1925 = vunpack.c.l.b16 %v1338
  %v1926 = vunpack.c.l.b16 %v1352
  %v1927 = vunpack.c.l.b16 %v1366
  %v1928 = vunpack.c.l.b16 %v1380
  %v1929 = vunpack.c.l.b16 %v1394
  %v1930 = vunpack.c.l.b16 %v1408
  %v1931 = vunpack.c.l.b16 %v1422
  %v1932 = vunpack.c.l.b16 %v1436
  %v1933 = vunpack.c.l.b16 %v1450
  %v1934 = vunpack.c.l.b16 %v1464
  %v1935 = vunpack.c.l.b16 %v1478
  %v1936 = vunpack.c.l.b16 %v1492
  %v1937 = vunpack.c.l.b16 %v1506
  %v1938 = vunpack.c.l.b16 %v1520
  %v1939 = vunpack.c.l.b16 %v1534
  %v1940 = vunpack.c.l.b16 %v1548
  %v1941 = vpack.c.b16 %v1926, %v1925
  %v1942 = vpack.c.b16 %v1928, %v1927
  %v1943 = vpack.c.b16 %v1930, %v1929
  %v1944 = vpack.c.b16 %v1932, %v1931
  %v1945 = vpack.c.b16 %v1934, %v1933
  %v1946 = vpack.c.b16 %v1936, %v1935
  %v1947 = vpack.c.b16 %v1938, %v1937
  %v1948 = vpack.c.b16 %v1940, %v1939
  %1949 = vrot.lane.b32.xlu0 %v1941, 64
  %v1950 = vpop.permute.xlu0 %1949
  %1951 = vrot.lane.b32.xlu0 %v1942, 64
  %v1952 = vpop.permute.xlu0 %1951
  %1953 = vrot.lane.b32.xlu0 %v1943, 64
  %v1954 = vpop.permute.xlu0 %1953
  %1955 = vrot.lane.b32.xlu0 %v1944, 64
  %v1956 = vpop.permute.xlu0 %1955
  %1957 = vrot.lane.b32.xlu0 %v1945, 64
  %v1958 = vpop.permute.xlu0 %1957
  %1959 = vrot.lane.b32.xlu0 %v1946, 64
  %v1960 = vpop.permute.xlu0 %1959
  %1961 = vrot.lane.b32.xlu0 %v1947, 64
  %v1962 = vpop.permute.xlu0 %1961
  %1963 = vrot.lane.b32.xlu0 %v1948, 64
  %v1964 = vpop.permute.xlu0 %1963
  %v1965 = vunpack.c.l.b16 %v1600
  %v1966 = vunpack.c.l.b16 %v1604
  %v1967 = vunpack.c.l.b16 %v1608
  %v1968 = vunpack.c.l.b16 %v1612
  %v1969 = vunpack.c.l.b16 %v1616
  %v1970 = vunpack.c.l.b16 %v1620
  %v1971 = vunpack.c.l.b16 %v1624
  %v1972 = vunpack.c.l.b16 %v1628
  %v1973 = vunpack.c.l.b16 %v1632
  %v1974 = vunpack.c.l.b16 %v1636
  %v1975 = vunpack.c.l.b16 %v1640
  %v1976 = vunpack.c.l.b16 %v1644
  %v1977 = vunpack.c.l.b16 %v1648
  %v1978 = vunpack.c.l.b16 %v1652
  %v1979 = vunpack.c.l.b16 %v1656
  %v1980 = vunpack.c.l.b16 %v1660
  %v1981 = vpack.c.b16 %v1966, %v1965
  %v1982 = vpack.c.b16 %v1968, %v1967
  %v1983 = vpack.c.b16 %v1970, %v1969
  %v1984 = vpack.c.b16 %v1972, %v1971
  %v1985 = vpack.c.b16 %v1974, %v1973
  %v1986 = vpack.c.b16 %v1976, %v1975
  %v1987 = vpack.c.b16 %v1978, %v1977
  %v1988 = vpack.c.b16 %v1980, %v1979
  %vm1989 = vcmask 523264
  %v1992 = vsel %vm1989, %v1693, %v1726
  %v1996 = vsel %vm1989, %v1694, %v1728
  %v2000 = vsel %vm1989, %v1695, %v1730
  %v2004 = vsel %vm1989, %v1696, %v1732
  %v2008 = vsel %vm1989, %v1697, %v1734
  %v2012 = vsel %vm1989, %v1698, %v1736
  %v2016 = vsel %vm1989, %v1699, %v1738
  %v2020 = vsel %vm1989, %v1700, %v1740
  %v2024 = vsel %vm1989, %v1757, %v1806
  %v2028 = vsel %vm1989, %v1758, %v1808
  %v2032 = vsel %vm1989, %v1759, %v1810
  %v2036 = vsel %vm1989, %v1760, %v1812
  %v2040 = vsel %vm1989, %v1761, %v1814
  %v2044 = vsel %vm1989, %v1762, %v1816
  %v2048 = vsel %vm1989, %v1763, %v1818
  %v2052 = vsel %vm1989, %v1764, %v1820
  %v2056 = vsel %vm1989, %v1837, %v1870
  %v2060 = vsel %vm1989, %v1838, %v1872
  %v2064 = vsel %vm1989, %v1839, %v1874
  %v2068 = vsel %vm1989, %v1840, %v1876
  %v2072 = vsel %vm1989, %v1841, %v1878
  %v2076 = vsel %vm1989, %v1842, %v1880
  %v2080 = vsel %vm1989, %v1843, %v1882
  %v2084 = vsel %vm1989, %v1844, %v1884
  %v2088 = vsel %vm1989, %v1917, %v1950
  %v2092 = vsel %vm1989, %v1918, %v1952
  %v2096 = vsel %vm1989, %v1919, %v1954
  %v2100 = vsel %vm1989, %v1920, %v1956
  %v2104 = vsel %vm1989, %v1921, %v1958
  %v2108 = vsel %vm1989, %v1922, %v1960
  %v2112 = vsel %vm1989, %v1923, %v1962
  %v2116 = vsel %vm1989, %v1924, %v1964
  %v2118 = vld [vmem:[%s4] sm:$0xf]
  %v2119 = vld [vmem:[%s4 + $0x4] sm:$0xf]
  %v2120 = vld [vmem:[%s4 + $0x8] sm:$0xf]
  %v2121 = vld [vmem:[%s4 + $0xc] sm:$0xf]
  %v2122 = vld [vmem:[%s4 + $0x10] sm:$0xf]
  %v2123 = vld [vmem:[%s4 + $0x14] sm:$0xf]
  %v2124 = vld [vmem:[%s4 + $0x18] sm:$0xf]
  %v2125 = vld [vmem:[%s4 + $0x1c] sm:$0xf]
  %v2126 = vld [vmem:[%s4 + $0x20] sm:$0xf]
  %v2127 = vld [vmem:[%s4 + $0x24] sm:$0xf]
  %v2128 = vld [vmem:[%s4 + $0x28] sm:$0xf]
  %v2129 = vld [vmem:[%s4 + $0x2c] sm:$0xf]
  %v2130 = vld [vmem:[%s4 + $0x30] sm:$0xf]
  %v2131 = vld [vmem:[%s4 + $0x34] sm:$0xf]
  %v2132 = vld [vmem:[%s4 + $0x38] sm:$0xf]
  %v2133 = vld [vmem:[%s4 + $0x3c] sm:$0xf]
  %v2134 = vld [vmem:[%s4 + $0x40] sm:$0xf]
  %v2135 = vld [vmem:[%s4 + $0x44] sm:$0xf]
  %v2136 = vld [vmem:[%s4 + $0x48] sm:$0xf]
  %v2137 = vld [vmem:[%s4 + $0x4c] sm:$0xf]
  %v2138 = vld [vmem:[%s4 + $0x50] sm:$0xf]
  %v2139 = vld [vmem:[%s4 + $0x54] sm:$0xf]
  %v2140 = vld [vmem:[%s4 + $0x58] sm:$0xf]
  %v2141 = vld [vmem:[%s4 + $0x5c] sm:$0xf]
  %v2142 = vld [vmem:[%s4 + $0x60] sm:$0xf]
  %v2143 = vld [vmem:[%s4 + $0x64] sm:$0xf]
  %v2144 = vld [vmem:[%s4 + $0x68] sm:$0xf]
  %v2145 = vld [vmem:[%s4 + $0x6c] sm:$0xf]
  %v2146 = vld [vmem:[%s4 + $0x70] sm:$0xf]
  %v2147 = vld [vmem:[%s4 + $0x74] sm:$0xf]
  %v2148 = vld [vmem:[%s4 + $0x78] sm:$0xf]
  %v2149 = vld [vmem:[%s4 + $0x7c] sm:$0xf]
  %v2150 = vld [vmem:[%s4 + $0x80] sm:$0xf]
  %v2151 = vld [vmem:[%s4 + $0x84] sm:$0xf]
  %v2152 = vld [vmem:[%s4 + $0x88] sm:$0xf]
  %v2153 = vld [vmem:[%s4 + $0x8c] sm:$0xf]
  %v2154 = vld [vmem:[%s4 + $0x90] sm:$0xf]
  %v2155 = vld [vmem:[%s4 + $0x94] sm:$0xf]
  %v2156 = vld [vmem:[%s4 + $0x98] sm:$0xf]
  %v2157 = vld [vmem:[%s4 + $0x9c] sm:$0xf]
  %v2158 = vld [vmem:[%s4 + $0xa0] sm:$0xf]
  %v2159 = vld [vmem:[%s4 + $0xa4] sm:$0xf]
  %v2160 = vld [vmem:[%s4 + $0xa8] sm:$0xf]
  %v2161 = vld [vmem:[%s4 + $0xac] sm:$0xf]
  %v2162 = vld [vmem:[%s4 + $0xb0] sm:$0xf]
  %v2163 = vld [vmem:[%s4 + $0xb4] sm:$0xf]
  %v2164 = vld [vmem:[%s4 + $0xb8] sm:$0xf]
  %v2165 = vld [vmem:[%s4 + $0xbc] sm:$0xf]
  %v2166 = vld [vmem:[%s4 + $0xc0] sm:$0xf]
  %v2167 = vld [vmem:[%s4 + $0xc4] sm:$0xf]
  %v2168 = vld [vmem:[%s4 + $0xc8] sm:$0xf]
  %v2169 = vld [vmem:[%s4 + $0xcc] sm:$0xf]
  %v2170 = vld [vmem:[%s4 + $0xd0] sm:$0xf]
  %v2171 = vld [vmem:[%s4 + $0xd4] sm:$0xf]
  %v2172 = vld [vmem:[%s4 + $0xd8] sm:$0xf]
  %v2173 = vld [vmem:[%s4 + $0xdc] sm:$0xf]
  %v2174 = vld [vmem:[%s4 + $0xe0] sm:$0xf]
  %v2175 = vld [vmem:[%s4 + $0xe4] sm:$0xf]
  %v2176 = vld [vmem:[%s4 + $0xe8] sm:$0xf]
  %v2177 = vld [vmem:[%s4 + $0xec] sm:$0xf]
  %v2178 = vld [vmem:[%s4 + $0xf0] sm:$0xf]
  %v2179 = vld [vmem:[%s4 + $0xf4] sm:$0xf]
  %v2180 = vld [vmem:[%s4 + $0xf8] sm:$0xf]
  %v2181 = vld [vmem:[%s4 + $0xfc] sm:$0xf]
  %v2182 = vld [vmem:[%s4 + $0x100] sm:$0xf]
  %v2183 = vld [vmem:[%s4 + $0x104] sm:$0xf]
  %v2184 = vld [vmem:[%s4 + $0x108] sm:$0xf]
  %v2185 = vld [vmem:[%s4 + $0x10c] sm:$0xf]
  %v2186 = vld [vmem:[%s4 + $0x110] sm:$0xf]
  %v2187 = vld [vmem:[%s4 + $0x114] sm:$0xf]
  %v2188 = vld [vmem:[%s4 + $0x118] sm:$0xf]
  %v2189 = vld [vmem:[%s4 + $0x11c] sm:$0xf]
  %v2262 = vunpack.c.l.b16 %v2118
  %v2263 = vunpack.c.l.b16 %v2119
  %v2264 = vunpack.c.l.b16 %v2120
  %v2265 = vunpack.c.l.b16 %v2121
  %v2266 = vunpack.c.l.b16 %v2122
  %v2267 = vunpack.c.l.b16 %v2123
  %v2268 = vunpack.c.l.b16 %v2124
  %v2269 = vunpack.c.l.b16 %v2125
  %v2270 = vunpack.c.l.b16 %v2126
  %v2271 = vunpack.c.l.b16 %v2127
  %v2272 = vunpack.c.l.b16 %v2128
  %v2273 = vunpack.c.l.b16 %v2129
  %v2274 = vunpack.c.l.b16 %v2130
  %v2275 = vunpack.c.l.b16 %v2131
  %v2276 = vunpack.c.l.b16 %v2132
  %v2277 = vunpack.c.l.b16 %v2133
  %v2278 = vunpack.c.l.b16 %v2134
  %v2279 = vunpack.c.l.b16 %v2135
  %v2280 = vunpack.c.l.b16 %v2136
  %v2281 = vunpack.c.l.b16 %v2137
  %v2282 = vunpack.c.l.b16 %v2138
  %v2283 = vunpack.c.l.b16 %v2139
  %v2284 = vunpack.c.l.b16 %v2140
  %v2285 = vunpack.c.l.b16 %v2141
  %v2286 = vunpack.c.l.b16 %v2142
  %v2287 = vunpack.c.l.b16 %v2143
  %v2288 = vunpack.c.l.b16 %v2144
  %v2289 = vunpack.c.l.b16 %v2145
  %v2290 = vunpack.c.l.b16 %v2146
  %v2291 = vunpack.c.l.b16 %v2147
  %v2292 = vunpack.c.l.b16 %v2148
  %v2293 = vunpack.c.l.b16 %v2149
  %v2294 = vunpack.c.l.b16 %v2150
  %v2295 = vunpack.c.l.b16 %v2151
  %v2296 = vunpack.c.l.b16 %v2152
  %v2297 = vunpack.c.l.b16 %v2153
  %v2298 = vunpack.c.l.b16 %v2154
  %v2299 = vunpack.c.l.b16 %v2155
  %v2300 = vunpack.c.l.b16 %v2156
  %v2301 = vunpack.c.l.b16 %v2157
  %v2302 = vunpack.c.l.b16 %v2158
  %v2303 = vunpack.c.l.b16 %v2159
  %v2304 = vunpack.c.l.b16 %v2160
  %v2305 = vunpack.c.l.b16 %v2161
  %v2306 = vunpack.c.l.b16 %v2162
  %v2307 = vunpack.c.l.b16 %v2163
  %v2308 = vunpack.c.l.b16 %v2164
  %v2309 = vunpack.c.l.b16 %v2165
  %v2310 = vunpack.c.l.b16 %v2166
  %v2311 = vunpack.c.l.b16 %v2167
  %v2312 = vunpack.c.l.b16 %v2168
  %v2313 = vunpack.c.l.b16 %v2169
  %v2314 = vunpack.c.l.b16 %v2170
  %v2315 = vunpack.c.l.b16 %v2171
  %v2316 = vunpack.c.l.b16 %v2172
  %v2317 = vunpack.c.l.b16 %v2173
  %v2318 = vunpack.c.l.b16 %v2174
  %v2319 = vunpack.c.l.b16 %v2175
  %v2320 = vunpack.c.l.b16 %v2176
  %v2321 = vunpack.c.l.b16 %v2177
  %v2322 = vunpack.c.l.b16 %v2178
  %v2323 = vunpack.c.l.b16 %v2179
  %v2324 = vunpack.c.l.b16 %v2180
  %v2325 = vunpack.c.l.b16 %v2181
  %v2326 = vunpack.c.l.b16 %v2182
  %v2327 = vunpack.c.l.b16 %v2183
  %v2328 = vunpack.c.l.b16 %v2184
  %v2329 = vunpack.c.l.b16 %v2185
  %v2330 = vunpack.c.l.b16 %v2186
  %v2331 = vunpack.c.l.b16 %v2187
  %v2332 = vunpack.c.l.b16 %v2188
  %v2333 = vunpack.c.l.b16 %v2189
  %v2334 = vpack.c.b16 %v2263, %v2262
  %v2335 = vpack.c.b16 %v2265, %v2264
  %v2336 = vpack.c.b16 %v2267, %v2266
  %v2337 = vpack.c.b16 %v2269, %v2268
  %v2338 = vpack.c.b16 %v2271, %v2270
  %v2339 = vpack.c.b16 %v2273, %v2272
  %v2340 = vpack.c.b16 %v2275, %v2274
  %v2341 = vpack.c.b16 %v2277, %v2276
  %v2342 = vpack.c.b16 %v2279, %v2278
  %v2343 = vpack.c.b16 %v2281, %v2280
  %v2344 = vpack.c.b16 %v2283, %v2282
  %v2345 = vpack.c.b16 %v2285, %v2284
  %v2346 = vpack.c.b16 %v2287, %v2286
  %v2347 = vpack.c.b16 %v2289, %v2288
  %v2348 = vpack.c.b16 %v2291, %v2290
  %v2349 = vpack.c.b16 %v2293, %v2292
  %v2350 = vpack.c.b16 %v2295, %v2294
  %v2351 = vpack.c.b16 %v2297, %v2296
  %v2352 = vpack.c.b16 %v2299, %v2298
  %v2353 = vpack.c.b16 %v2301, %v2300
  %v2354 = vpack.c.b16 %v2303, %v2302
  %v2355 = vpack.c.b16 %v2305, %v2304
  %v2356 = vpack.c.b16 %v2307, %v2306
  %v2357 = vpack.c.b16 %v2309, %v2308
  %v2358 = vpack.c.b16 %v2311, %v2310
  %v2359 = vpack.c.b16 %v2313, %v2312
  %v2360 = vpack.c.b16 %v2315, %v2314
  %v2361 = vpack.c.b16 %v2317, %v2316
  %v2362 = vpack.c.b16 %v2319, %v2318
  %v2363 = vpack.c.b16 %v2321, %v2320
  %v2364 = vpack.c.b16 %v2323, %v2322
  %v2365 = vpack.c.b16 %v2325, %v2324
  %v2366 = vpack.c.b16 %v2327, %v2326
  %v2367 = vpack.c.b16 %v2329, %v2328
  %v2368 = vpack.c.b16 %v2331, %v2330
  %v2369 = vpack.c.b16 %v2333, %v2332
  %v2407 = vsel %vm1989, %v1981, 0
  %v2410 = vsel %vm1989, %v1982, 0
  %v2413 = vsel %vm1989, %v1983, 0
  %v2416 = vsel %vm1989, %v1984, 0
  %v2419 = vsel %vm1989, %v1985, 0
  %v2422 = vsel %vm1989, %v1986, 0
  %v2425 = vsel %vm1989, %v1987, 0
  %v2428 = vsel %vm1989, %v1988, 0
  %2430 = vmatpush.bf16.msra.mxu0 %v2341
  %2431 = vmatpush.bf16.msra.mxu0 %v2340
  %2432 = vmatpush.bf16.msra.mxu0 %v2339
  %2433 = vmatpush.bf16.msra.mxu0 %v2338
  %2434 = vmatpush.bf16.msra.mxu0 %v2337
  %2435 = vmatpush.bf16.msra.mxu0 %v2336
  %2436 = vmatpush.bf16.msra.mxu0 %v2335
  %2437 = vmatpush.bf16.msra.mxu0 %v2334
  %2438 = vmatmul.bf16.gmra.mxu0 %v1992
  %v2439 = vpop.f32.mrf.mxu0
  %v2440 = vadd.f32 0.0, %v2439
  %v2441 = vpop.f32.mrf.mxu0
  %v2442 = vadd.f32 0.0, %v2441
  %2443 = vmatmul.bf16.gmra.mxu0 %v1996
  %v2444 = vpop.f32.mrf.mxu0
  %v2445 = vadd.f32 0.0, %v2444
  %v2446 = vpop.f32.mrf.mxu0
  %v2447 = vadd.f32 0.0, %v2446
  %2448 = vmatmul.bf16.gmra.mxu0 %v2000
  %v2449 = vpop.f32.mrf.mxu0
  %v2450 = vadd.f32 0.0, %v2449
  %v2451 = vpop.f32.mrf.mxu0
  %v2452 = vadd.f32 0.0, %v2451
  %2453 = vmatmul.bf16.gmra.mxu0 %v2004
  %v2454 = vpop.f32.mrf.mxu0
  %v2455 = vadd.f32 0.0, %v2454
  %v2456 = vpop.f32.mrf.mxu0
  %v2457 = vadd.f32 0.0, %v2456
  %2458 = vmatmul.bf16.gmra.mxu0 %v2008
  %v2459 = vpop.f32.mrf.mxu0
  %v2460 = vadd.f32 0.0, %v2459
  %v2461 = vpop.f32.mrf.mxu0
  %v2462 = vadd.f32 0.0, %v2461
  %2463 = vmatmul.bf16.gmra.mxu0 %v2012
  %v2464 = vpop.f32.mrf.mxu0
  %v2465 = vadd.f32 0.0, %v2464
  %v2466 = vpop.f32.mrf.mxu0
  %v2467 = vadd.f32 0.0, %v2466
  %2468 = vmatmul.bf16.gmra.mxu0 %v2016
  %v2469 = vpop.f32.mrf.mxu0
  %v2470 = vadd.f32 0.0, %v2469
  %v2471 = vpop.f32.mrf.mxu0
  %v2472 = vadd.f32 0.0, %v2471
  %2473 = vmatmul.bf16.gmra.mxu0 %v2020
  %v2474 = vpop.f32.mrf.mxu0
  %v2475 = vadd.f32 0.0, %v2474
  %v2476 = vpop.f32.mrf.mxu0
  %v2477 = vadd.f32 0.0, %v2476
  %2478 = vdwg.mxu0
  %2479 = vmatpush.bf16.msra.mxu0 %v2349
  %2480 = vmatpush.bf16.msra.mxu0 %v2348
  %2481 = vmatpush.bf16.msra.mxu0 %v2347
  %2482 = vmatpush.bf16.msra.mxu0 %v2346
  %2483 = vmatpush.bf16.msra.mxu0 %v2345
  %2484 = vmatpush.bf16.msra.mxu0 %v2344
  %2485 = vmatpush.bf16.msra.mxu0 %v2343
  %2486 = vmatpush.bf16.msra.mxu0 %v2342
  %2487 = vmatmul.bf16.gmra.mxu0 %v2024
  %v2488 = vpop.f32.mrf.mxu0
  %v2489 = vadd.f32 %v2440, %v2488
  %v2490 = vpop.f32.mrf.mxu0
  %v2491 = vadd.f32 %v2442, %v2490
  %2492 = vmatmul.bf16.gmra.mxu0 %v2028
  %v2493 = vpop.f32.mrf.mxu0
  %v2494 = vadd.f32 %v2445, %v2493
  %v2495 = vpop.f32.mrf.mxu0
  %v2496 = vadd.f32 %v2447, %v2495
  %2497 = vmatmul.bf16.gmra.mxu0 %v2032
  %v2498 = vpop.f32.mrf.mxu0
  %v2499 = vadd.f32 %v2450, %v2498
  %v2500 = vpop.f32.mrf.mxu0
  %v2501 = vadd.f32 %v2452, %v2500
  %2502 = vmatmul.bf16.gmra.mxu0 %v2036
  %v2503 = vpop.f32.mrf.mxu0
  %v2504 = vadd.f32 %v2455, %v2503
  %v2505 = vpop.f32.mrf.mxu0
  %v2506 = vadd.f32 %v2457, %v2505
  %2507 = vmatmul.bf16.gmra.mxu0 %v2040
  %v2508 = vpop.f32.mrf.mxu0
  %v2509 = vadd.f32 %v2460, %v2508
  %v2510 = vpop.f32.mrf.mxu0
  %v2511 = vadd.f32 %v2462, %v2510
  %2512 = vmatmul.bf16.gmra.mxu0 %v2044
  %v2513 = vpop.f32.mrf.mxu0
  %v2514 = vadd.f32 %v2465, %v2513
  %v2515 = vpop.f32.mrf.mxu0
  %v2516 = vadd.f32 %v2467, %v2515
  %2517 = vmatmul.bf16.gmra.mxu0 %v2048
  %v2518 = vpop.f32.mrf.mxu0
  %v2519 = vadd.f32 %v2470, %v2518
  %v2520 = vpop.f32.mrf.mxu0
  %v2521 = vadd.f32 %v2472, %v2520
  %2522 = vmatmul.bf16.gmra.mxu0 %v2052
  %v2523 = vpop.f32.mrf.mxu0
  %v2524 = vadd.f32 %v2475, %v2523
  %v2525 = vpop.f32.mrf.mxu0
  %v2526 = vadd.f32 %v2477, %v2525
  %2527 = vdwg.mxu0
  %2528 = vmatpush.bf16.msra.mxu0 %v2357
  %2529 = vmatpush.bf16.msra.mxu0 %v2356
  %2530 = vmatpush.bf16.msra.mxu0 %v2355
  %2531 = vmatpush.bf16.msra.mxu0 %v2354
  %2532 = vmatpush.bf16.msra.mxu0 %v2353
  %2533 = vmatpush.bf16.msra.mxu0 %v2352
  %2534 = vmatpush.bf16.msra.mxu0 %v2351
  %2535 = vmatpush.bf16.msra.mxu0 %v2350
  %2536 = vmatmul.bf16.gmra.mxu0 %v2056
  %v2537 = vpop.f32.mrf.mxu0
  %v2538 = vadd.f32 %v2489, %v2537
  %v2539 = vpop.f32.mrf.mxu0
  %v2540 = vadd.f32 %v2491, %v2539
  %2541 = vmatmul.bf16.gmra.mxu0 %v2060
  %v2542 = vpop.f32.mrf.mxu0
  %v2543 = vadd.f32 %v2494, %v2542
  %v2544 = vpop.f32.mrf.mxu0
  %v2545 = vadd.f32 %v2496, %v2544
  %2546 = vmatmul.bf16.gmra.mxu0 %v2064
  %v2547 = vpop.f32.mrf.mxu0
  %v2548 = vadd.f32 %v2499, %v2547
  %v2549 = vpop.f32.mrf.mxu0
  %v2550 = vadd.f32 %v2501, %v2549
  %2551 = vmatmul.bf16.gmra.mxu0 %v2068
  %v2552 = vpop.f32.mrf.mxu0
  %v2553 = vadd.f32 %v2504, %v2552
  %v2554 = vpop.f32.mrf.mxu0
  %v2555 = vadd.f32 %v2506, %v2554
  %2556 = vmatmul.bf16.gmra.mxu0 %v2072
  %v2557 = vpop.f32.mrf.mxu0
  %v2558 = vadd.f32 %v2509, %v2557
  %v2559 = vpop.f32.mrf.mxu0
  %v2560 = vadd.f32 %v2511, %v2559
  %2561 = vmatmul.bf16.gmra.mxu0 %v2076
  %v2562 = vpop.f32.mrf.mxu0
  %v2563 = vadd.f32 %v2514, %v2562
  %v2564 = vpop.f32.mrf.mxu0
  %v2565 = vadd.f32 %v2516, %v2564
  %2566 = vmatmul.bf16.gmra.mxu0 %v2080
  %v2567 = vpop.f32.mrf.mxu0
  %v2568 = vadd.f32 %v2519, %v2567
  %v2569 = vpop.f32.mrf.mxu0
  %v2570 = vadd.f32 %v2521, %v2569
  %2571 = vmatmul.bf16.gmra.mxu0 %v2084
  %v2572 = vpop.f32.mrf.mxu0
  %v2573 = vadd.f32 %v2524, %v2572
  %v2574 = vpop.f32.mrf.mxu0
  %v2575 = vadd.f32 %v2526, %v2574
  %2576 = vdwg.mxu0
  %2577 = vmatpush.bf16.msra.mxu0 %v2365
  %2578 = vmatpush.bf16.msra.mxu0 %v2364
  %2579 = vmatpush.bf16.msra.mxu0 %v2363
  %2580 = vmatpush.bf16.msra.mxu0 %v2362
  %2581 = vmatpush.bf16.msra.mxu0 %v2361
  %2582 = vmatpush.bf16.msra.mxu0 %v2360
  %2583 = vmatpush.bf16.msra.mxu0 %v2359
  %2584 = vmatpush.bf16.msra.mxu0 %v2358
  %2585 = vmatmul.bf16.gmra.mxu0 %v2088
  %v2586 = vpop.f32.mrf.mxu0
  %v2587 = vadd.f32 %v2538, %v2586
  %v2588 = vpop.f32.mrf.mxu0
  %v2589 = vadd.f32 %v2540, %v2588
  %2590 = vmatmul.bf16.gmra.mxu0 %v2092
  %v2591 = vpop.f32.mrf.mxu0
  %v2592 = vadd.f32 %v2543, %v2591
  %v2593 = vpop.f32.mrf.mxu0
  %v2594 = vadd.f32 %v2545, %v2593
  %2595 = vmatmul.bf16.gmra.mxu0 %v2096
  %v2596 = vpop.f32.mrf.mxu0
  %v2597 = vadd.f32 %v2548, %v2596
  %v2598 = vpop.f32.mrf.mxu0
  %v2599 = vadd.f32 %v2550, %v2598
  %2600 = vmatmul.bf16.gmra.mxu0 %v2100
  %v2601 = vpop.f32.mrf.mxu0
  %v2602 = vadd.f32 %v2553, %v2601
  %v2603 = vpop.f32.mrf.mxu0
  %v2604 = vadd.f32 %v2555, %v2603
  %2605 = vmatmul.bf16.gmra.mxu0 %v2104
  %v2606 = vpop.f32.mrf.mxu0
  %v2607 = vadd.f32 %v2558, %v2606
  %v2608 = vpop.f32.mrf.mxu0
  %v2609 = vadd.f32 %v2560, %v2608
  %2610 = vmatmul.bf16.gmra.mxu0 %v2108
  %v2611 = vpop.f32.mrf.mxu0
  %v2612 = vadd.f32 %v2563, %v2611
  %v2613 = vpop.f32.mrf.mxu0
  %v2614 = vadd.f32 %v2565, %v2613
  %2615 = vmatmul.bf16.gmra.mxu0 %v2112
  %v2616 = vpop.f32.mrf.mxu0
  %v2617 = vadd.f32 %v2568, %v2616
  %v2618 = vpop.f32.mrf.mxu0
  %v2619 = vadd.f32 %v2570, %v2618
  %2620 = vmatmul.bf16.gmra.mxu0 %v2116
  %v2621 = vpop.f32.mrf.mxu0
  %v2622 = vadd.f32 %v2573, %v2621
  %v2623 = vpop.f32.mrf.mxu0
  %v2624 = vadd.f32 %v2575, %v2623
  %2625 = vdwg.mxu0
  %2626 = vmatpush.bf16.msra.mxu0 0
  %2627 = vmatpush.bf16.msra.mxu0 0
  %2628 = vmatpush.bf16.msra.mxu0 0
  %2629 = vmatpush.bf16.msra.mxu0 0
  %2630 = vmatpush.bf16.msra.mxu0 %v2369
  %2631 = vmatpush.bf16.msra.mxu0 %v2368
  %2632 = vmatpush.bf16.msra.mxu0 %v2367
  %2633 = vmatpush.bf16.msra.mxu0 %v2366
  %2634 = vmatmul.bf16.gmra.mxu0 %v2407
  %v2635 = vpop.f32.mrf.mxu0
  %v2636 = vadd.f32 %v2587, %v2635
  %v2637 = vpop.f32.mrf.mxu0
  %v2638 = vadd.f32 %v2589, %v2637
  %2639 = vmatmul.bf16.gmra.mxu0 %v2410
  %v2640 = vpop.f32.mrf.mxu0
  %v2641 = vadd.f32 %v2592, %v2640
  %v2642 = vpop.f32.mrf.mxu0
  %v2643 = vadd.f32 %v2594, %v2642
  %2644 = vmatmul.bf16.gmra.mxu0 %v2413
  %v2645 = vpop.f32.mrf.mxu0
  %v2646 = vadd.f32 %v2597, %v2645
  %v2647 = vpop.f32.mrf.mxu0
  %v2648 = vadd.f32 %v2599, %v2647
  %2649 = vmatmul.bf16.gmra.mxu0 %v2416
  %v2650 = vpop.f32.mrf.mxu0
  %v2651 = vadd.f32 %v2602, %v2650
  %v2652 = vpop.f32.mrf.mxu0
  %v2653 = vadd.f32 %v2604, %v2652
  %2654 = vmatmul.bf16.gmra.mxu0 %v2419
  %v2655 = vpop.f32.mrf.mxu0
  %v2656 = vadd.f32 %v2607, %v2655
  %v2657 = vpop.f32.mrf.mxu0
  %v2658 = vadd.f32 %v2609, %v2657
  %2659 = vmatmul.bf16.gmra.mxu0 %v2422
  %v2660 = vpop.f32.mrf.mxu0
  %v2661 = vadd.f32 %v2612, %v2660
  %v2662 = vpop.f32.mrf.mxu0
  %v2663 = vadd.f32 %v2614, %v2662
  %2664 = vmatmul.bf16.gmra.mxu0 %v2425
  %v2665 = vpop.f32.mrf.mxu0
  %v2666 = vadd.f32 %v2617, %v2665
  %v2667 = vpop.f32.mrf.mxu0
  %v2668 = vadd.f32 %v2619, %v2667
  %2669 = vmatmul.bf16.gmra.mxu0 %v2428
  %v2670 = vpop.f32.mrf.mxu0
  %v2671 = vadd.f32 %v2622, %v2670
  %v2672 = vpop.f32.mrf.mxu0
  %v2673 = vadd.f32 %v2624, %v2672
  %2674 = vdwg.mxu0
  %v2675 = vld [vmem:[%s5] sm:$0x1]
  %v2677 = vperm.slane %v2675, 0
  %v2679 = vmul.f32 %v2636, %v2677
  %v2680 = vmul.f32 %v2638, %v2677
  %v2681 = vmul.f32 %v2641, %v2677
  %v2682 = vmul.f32 %v2643, %v2677
  %v2683 = vmul.f32 %v2646, %v2677
  %v2684 = vmul.f32 %v2648, %v2677
  %v2685 = vmul.f32 %v2651, %v2677
  %v2686 = vmul.f32 %v2653, %v2677
  %v2687 = vmul.f32 %v2656, %v2677
  %v2688 = vmul.f32 %v2658, %v2677
  %v2689 = vmul.f32 %v2661, %v2677
  %v2690 = vmul.f32 %v2663, %v2677
  %v2691 = vmul.f32 %v2666, %v2677
  %v2692 = vmul.f32 %v2668, %v2677
  %v2693 = vmul.f32 %v2671, %v2677
  %v2694 = vmul.f32 %v2673, %v2677
  %v2695 = vld [vmem:[%s6] sm:$0x1]
  %v2697 = vperm.slane %v2695, 0
  %v2699 = vadd.f32 %v2679, %v2697
  %v2700 = vadd.f32 %v2680, %v2697
  %v2701 = vadd.f32 %v2681, %v2697
  %v2702 = vadd.f32 %v2682, %v2697
  %v2703 = vadd.f32 %v2683, %v2697
  %v2704 = vadd.f32 %v2684, %v2697
  %v2705 = vadd.f32 %v2685, %v2697
  %v2706 = vadd.f32 %v2686, %v2697
  %v2707 = vadd.f32 %v2687, %v2697
  %v2708 = vadd.f32 %v2688, %v2697
  %v2709 = vadd.f32 %v2689, %v2697
  %v2710 = vadd.f32 %v2690, %v2697
  %v2711 = vadd.f32 %v2691, %v2697
  %v2712 = vadd.f32 %v2692, %v2697
  %v2713 = vadd.f32 %v2693, %v2697
  %v2714 = vadd.f32 %v2694, %v2697
  %v2715 = vmax.f32 %v2699, 0.0
  %v2716 = vmax.f32 %v2700, 0.0
  %v2717 = vmax.f32 %v2701, 0.0
  %v2718 = vmax.f32 %v2702, 0.0
  %v2719 = vmax.f32 %v2703, 0.0
  %v2720 = vmax.f32 %v2704, 0.0
  %v2721 = vmax.f32 %v2705, 0.0
  %v2722 = vmax.f32 %v2706, 0.0
  %v2723 = vmax.f32 %v2707, 0.0
  %v2724 = vmax.f32 %v2708, 0.0
  %v2725 = vmax.f32 %v2709, 0.0
  %v2726 = vmax.f32 %v2710, 0.0
  %v2727 = vmax.f32 %v2711, 0.0
  %v2728 = vmax.f32 %v2712, 0.0
  %v2729 = vmax.f32 %v2713, 0.0
  %v2730 = vmax.f32 %v2714, 0.0
  %2731 = vst [vmem:[%s7] sm:$0xff] %v2715
  %2732 = vst [vmem:[%s7 + $0x8] sm:$0xff] %v2716
  %2733 = vst [vmem:[%s7 + $0x10] sm:$0xff] %v2717
  %2734 = vst [vmem:[%s7 + $0x18] sm:$0xff] %v2718
  %2735 = vst [vmem:[%s7 + $0x20] sm:$0xff] %v2719
  %2736 = vst [vmem:[%s7 + $0x28] sm:$0xff] %v2720
  %2737 = vst [vmem:[%s7 + $0x30] sm:$0xff] %v2721
  %2738 = vst [vmem:[%s7 + $0x38] sm:$0xff] %v2722
  %2739 = vst [vmem:[%s7 + $0x40] sm:$0xff] %v2723
  %2740 = vst [vmem:[%s7 + $0x48] sm:$0xff] %v2724
  %2741 = vst [vmem:[%s7 + $0x50] sm:$0xff] %v2725
  %2742 = vst [vmem:[%s7 + $0x58] sm:$0xff] %v2726
  %2743 = vst [vmem:[%s7 + $0x60] sm:$0xff] %v2727
  %2744 = vst [vmem:[%s7 + $0x68] sm:$0xff] %v2728
  %2745 = vst [vmem:[%s7 + $0x70] sm:$0xff] %v2729
  %2746 = vst [vmem:[%s7 + $0x78] sm:$0xff] %v2730
  // Predicated region
  $region30: #{diffdet_resnet_roi_pool_forward.2} parent=0 // pred_check
    _
  $region31: #{diffdet_resnet_roi_pool_forward.2} parent=0 // pred_check_branch
    %2748 = sbr.rel (0) target = $region33
  $region32: #{diffdet_resnet_roi_pool_forward.2} parent=0 // pred_region
    _
  $region33: #{diffdet_resnet_roi_pool_forward.2} parent=0 // pred_fallthru
    _
  // Predicated region
  $region34: #{diffdet_resnet_roi_pool_forward.2} parent=0 // pred_check
    _
  $region35: #{diffdet_resnet_roi_pool_forward.2} parent=0 // pred_check_branch
    %2750 = sbr.rel (0) target = $region37
  $region36: #{diffdet_resnet_roi_pool_forward.2} parent=0 // pred_region
    _
  $region37: #{diffdet_resnet_roi_pool_forward.2} parent=0 // pred_fallthru
    _

</llo_original>
